<compile_context>
chip_gen: v7x
topology: tpu7x:2x2x1
jax: 0.10.0
libtpu: 0.0.40
codegen_flags: <defaults>
</compile_context>

<pallas_src>
import jax
import jax.numpy as jnp
from jax.experimental import pallas as pl
from jax.experimental.pallas import tpu as pltpu


# ----------------------------------------------------------------------------
# Fused kernel: conv GEMM + bias + ReLU + flatten (in registers) + two-layer MLP.
# Single grid step; everything resident in VMEM; no scratch buffers.
# ----------------------------------------------------------------------------
def fused_kernel(patches_ref, wc_ref, bc_ref, w1_ref, b1_ref, w2_ref, b2_ref,
                 logits_ref, emb_ref):
    # patches_ref: (9*Cin, B*HW) f32  im2col matrix, row = (kh*3+kw)*Cin + c,
    #                                 col = b*HW + i*W + j   (built in wrapper)
    # wc_ref:      (Cout, 9*Cin) f32  im2col conv weight (same column ordering)
    # bc_ref:      (Cout, 1)     f32  conv bias (2-D for clean lane broadcast)
    # w1_ref:      (Cout*HW, E)  bf16 embedding weight
    # b1_ref:      (1, E)        f32
    # w2_ref:      (E, C)        f32
    # b2_ref:      (1, C)        f32
    # logits_ref:  (B, C) f32    emb_ref: (B, E) f32
    B = emb_ref.shape[0]
    Cout = wc_ref.shape[0]
    HW = patches_ref.shape[1] // B

    # --- conv as one MXU GEMM; lane-dense (Cout sublanes x B*HW lanes) output.
    feat = jnp.dot(wc_ref[...], patches_ref[...],
                   preferred_element_type=jnp.float32)        # (Cout, B*HW)
    feat = jnp.maximum(feat + bc_ref[...], 0.0)                # bias + ReLU (f32)

    # --- flatten exactly like torch nn.Flatten on NCHW conv output, in registers:
    #     flat[b, c*HW + p] = feat[c, b*HW + p]
    # Per-batch slices are lane-aligned (HW is a multiple of 128); no VMEM scratch.
    flat = jnp.concatenate(
        [feat[:, b * HW:(b + 1) * HW].reshape(1, Cout * HW) for b in range(B)],
        axis=0)                                                # (B, Cout*HW)

    # --- embedding_layer: bf16 operands, f32 accumulate, f32 bias add.
    emb = jnp.dot(flat.astype(w1_ref.dtype), w1_ref[...],
                  preferred_element_type=jnp.float32) + b1_ref[...]   # (B, E)
    emb_ref[...] = emb

    # --- classifier_layer (tiny f32 GEMM).
    logits_ref[...] = jnp.dot(emb, w2_ref[...],
                              preferred_element_type=jnp.float32) + b2_ref[...]


# ----------------------------------------------------------------------------
# Wrapper: im2col + parameter re-layout in XLA, then one pallas_call.
# ----------------------------------------------------------------------------
@jax.jit
def custom_model_forward(x_nchw, params):
    x = x_nchw.astype(jnp.float32)
    B, Cin, H, W = x.shape
    HW = H * W

    # Halo pad (padding=1) + im2col, all in the wrapper (cheap XLA slices):
    # patches[(kh*3+kw)*Cin + c, b*HW + i*W + j] = xpad[b, c, i+kh, j+kw]
    xp = jnp.pad(x, ((0, 0), (0, 0), (1, 1), (1, 1)))
    taps = [xp[:, :, kh:kh + H, kw:kw + W] for kh in range(3) for kw in range(3)]
    patches = jnp.stack(taps, axis=0)                          # (9, B, Cin, H, W)
    patches = jnp.transpose(patches, (0, 2, 1, 3, 4)).reshape(9 * Cin, B * HW)

    wc = params["conv_w"]                                      # (Cout, Cin, 3, 3) OIHW
    Cout = wc.shape[0]
    # im2col weight layout: column index = (kh*3 + kw)*Cin + c
    wc_mat = jnp.transpose(wc, (0, 2, 3, 1)).reshape(Cout, 9 * Cin)
    bc = params["conv_b"]                                      # (Cout, 1)

    # Narrow only the dominant matmul operand; f32 accumulate inside the kernel.
    w1 = params["w1"].astype(jnp.bfloat16)                     # (Cout*HW, E)
    b1 = params["b1"]                                          # (1, E)
    w2 = params["w2"]                                          # (E, C)
    b2 = params["b2"]                                          # (1, C)
    E, C = w1.shape[1], w2.shape[1]

    flops = 2 * (Cout * (9 * Cin) * (B * HW) + B * (Cout * HW) * E + B * E * C)
    bytes_accessed = (4 * (patches.size + wc_mat.size + bc.size + b1.size
                           + w2.size + b2.size + B * E + B * C)
                      + 2 * w1.size)

    vmem = lambda: pl.BlockSpec(memory_space=pltpu.MemorySpace.VMEM)
    logits, emb = pl.pallas_call(
        fused_kernel,
        out_shape=(
            jax.ShapeDtypeStruct((B, C), jnp.float32),         # logits  (forward)
            jax.ShapeDtypeStruct((B, E), jnp.float32),         # embedding (get_embedding)
        ),
        in_specs=[vmem() for _ in range(7)],
        out_specs=(vmem(), vmem()),
        cost_estimate=pl.CostEstimate(flops=flops, transcendentals=0,
                                      bytes_accessed=bytes_accessed),
    )(patches, wc_mat, bc, w1, b1, w2, b2)
    return logits, emb


# ----------------------------------------------------------------------------
# Deterministic parameter init + pure-JAX f32 reference for the correctness check.
# ----------------------------------------------------------------------------
def init_params(key, cin=4, cfeat=8, h=16, w=16, embed=32, classes=10):
    k = jax.random.split(key, 6)
    fan_conv = cin * 3 * 3
    fan1 = cfeat * h * w
    return {
        "conv_w": jax.random.normal(k[0], (cfeat, cin, 3, 3), jnp.float32)
                  / jnp.sqrt(fan_conv),                        # torch OIHW layout
        "conv_b": jax.random.normal(k[1], (cfeat, 1), jnp.float32) * 0.01,
        "w1": jax.random.normal(k[2], (fan1, embed), jnp.float32) / jnp.sqrt(fan1),
        "b1": jax.random.normal(k[3], (1, embed), jnp.float32) * 0.01,
        "w2": jax.random.normal(k[4], (embed, classes), jnp.float32) / jnp.sqrt(embed),
        "b2": jax.random.normal(k[5], (1, classes), jnp.float32) * 0.01,
    }


def reference_forward(x_nchw, params):
    feat = jax.lax.conv_general_dilated(
        x_nchw.astype(jnp.float32), params["conv_w"],
        window_strides=(1, 1), padding=((1, 1), (1, 1)),
        dimension_numbers=("NCHW", "OIHW", "NCHW"))
    feat = jnp.maximum(feat + params["conv_b"][:, 0][None, :, None, None], 0.0)
    flat = feat.reshape(feat.shape[0], -1)
    emb = flat @ params["w1"] + params["b1"]
    logits = emb @ params["w2"] + params["b2"]
    return logits, emb


if __name__ == "__main__":
    key = jax.random.PRNGKey(0)
    kx, kp = jax.random.split(key)
    B, Cin, H, W = 2, 4, 16, 16
    x = jax.random.normal(kx, (B, Cin, H, W), jnp.float32)     # NCHW, like torch
    params = init_params(kp, cin=Cin, h=H, w=W)

    logits, emb = custom_model_forward(x, params)
    logits = jax.block_until_ready(logits)
    emb = jax.block_until_ready(emb)

    ref_logits, ref_emb = reference_forward(x, params)
    assert logits.shape == (B, 10) and emb.shape == (B, 32)
    # Tolerance loosened vs the all-f32 version because w1 / the embedding-GEMM
    # operands are bf16 (f32 accumulate); expected abs error is ~2e-3.
    assert jnp.allclose(emb, ref_emb, atol=3e-2, rtol=3e-2), "embedding mismatch"
    assert jnp.allclose(logits, ref_logits, atol=3e-2, rtol=3e-2), "logits mismatch"
    print("KERNEL_OK")
</pallas_src>

<mosaic_0001>
module attributes {stable_mosaic.version = 11 : i64} {
  func.func @fused_kernel(%arg0: memref<36x512xf32, #tpu.memory_space<vmem>>, %arg1: memref<8x36xf32, #tpu.memory_space<vmem>>, %arg2: memref<8x1xf32, #tpu.memory_space<vmem>>, %arg3: memref<2048x32xbf16, #tpu.memory_space<vmem>>, %arg4: memref<1x32xf32, #tpu.memory_space<vmem>>, %arg5: memref<32x10xf32, #tpu.memory_space<vmem>>, %arg6: memref<1x10xf32, #tpu.memory_space<vmem>>, %arg7: memref<2x10xf32, #tpu.memory_space<vmem>>, %arg8: memref<2x32xf32, #tpu.memory_space<vmem>>) attributes {dimension_semantics = [], scalar_prefetch = 0 : i64, scratch_operands = 0 : i64, tpu.core_type = #tpu.core_type<tc>} {
    %c0 = arith.constant 0 : index
    %c0_0 = arith.constant 0 : index
    %0 = vector.load %arg1[%c0, %c0_0] : memref<8x36xf32, #tpu.memory_space<vmem>>, vector<8x36xf32>
    %c0_1 = arith.constant 0 : index
    %c0_2 = arith.constant 0 : index
    %1 = vector.load %arg0[%c0_1, %c0_2] : memref<36x512xf32, #tpu.memory_space<vmem>>, vector<36x512xf32>
    %cst = arith.constant dense<0.000000e+00> : vector<8x512xf32>
    %2 = tpu.matmul %0, %1, %cst {dimension_numbers = #tpu.dot_dimension_numbers<[1], [0], [0], [1], [0, 0, 1, 1], [], []>} : vector<8x36xf32>, vector<36x512xf32>, vector<8x512xf32> -> vector<8x512xf32>
    %c0_3 = arith.constant 0 : index
    %c0_4 = arith.constant 0 : index
    %3 = vector.load %arg2[%c0_3, %c0_4] : memref<8x1xf32, #tpu.memory_space<vmem>>, vector<8x1xf32>
    %4 = vector.broadcast %3 : vector<8x1xf32> to vector<8x512xf32>
    %5 = arith.addf %2, %4 : vector<8x512xf32>
    %cst_5 = arith.constant 0.000000e+00 : f32
    %6 = vector.broadcast %cst_5 : f32 to vector<8x512xf32>
    %7 = arith.maximumf %5, %6 : vector<8x512xf32>
    %8 = vector.extract_strided_slice %7 {offsets = [0, 0], sizes = [8, 256], strides = [1, 1]} : vector<8x512xf32> to vector<8x256xf32>
    %9 = vector.shape_cast %8 : vector<8x256xf32> to vector<1x2048xf32>
    %10 = vector.extract_strided_slice %7 {offsets = [0, 256], sizes = [8, 256], strides = [1, 1]} : vector<8x512xf32> to vector<8x256xf32>
    %11 = vector.shape_cast %10 : vector<8x256xf32> to vector<1x2048xf32>
    %12 = tpu.concatenate %9, %11 in 0 : vector<1x2048xf32>, vector<1x2048xf32> -> vector<2x2048xf32>
    %13 = arith.truncf %12 : vector<2x2048xf32> to vector<2x2048xbf16>
    %c0_6 = arith.constant 0 : index
    %c0_7 = arith.constant 0 : index
    %14 = vector.load %arg3[%c0_6, %c0_7] : memref<2048x32xbf16, #tpu.memory_space<vmem>>, vector<2048x32xbf16>
    %cst_8 = arith.constant dense<0.000000e+00> : vector<2x32xf32>
    %15 = tpu.matmul %13, %14, %cst_8 {dimension_numbers = #tpu.dot_dimension_numbers<[1], [0], [0], [1], [0, 0, 1, 1], [], []>} : vector<2x2048xbf16>, vector<2048x32xbf16>, vector<2x32xf32> -> vector<2x32xf32>
    %c0_9 = arith.constant 0 : index
    %c0_10 = arith.constant 0 : index
    %16 = vector.load %arg4[%c0_9, %c0_10] : memref<1x32xf32, #tpu.memory_space<vmem>>, vector<1x32xf32>
    %17 = vector.broadcast %16 : vector<1x32xf32> to vector<2x32xf32>
    %18 = arith.addf %15, %17 : vector<2x32xf32>
    %c0_11 = arith.constant 0 : index
    %c0_12 = arith.constant 0 : index
    %19 = vector.load %arg8[%c0_11, %c0_12] : memref<2x32xf32, #tpu.memory_space<vmem>>, vector<2x32xf32>
    tpu.vector_store %arg8[%c0_11, %c0_12], %18 {strides = array<i32>} : memref<2x32xf32, #tpu.memory_space<vmem>>, vector<2x32xf32>,
    %c0_13 = arith.constant 0 : index
    %c0_14 = arith.constant 0 : index
    %20 = vector.load %arg5[%c0_13, %c0_14] : memref<32x10xf32, #tpu.memory_space<vmem>>, vector<32x10xf32>
    %cst_15 = arith.constant dense<0.000000e+00> : vector<2x10xf32>
    %21 = tpu.matmul %18, %20, %cst_15 {dimension_numbers = #tpu.dot_dimension_numbers<[1], [0], [0], [1], [0, 0, 1, 1], [], []>} : vector<2x32xf32>, vector<32x10xf32>, vector<2x10xf32> -> vector<2x10xf32>
    %c0_16 = arith.constant 0 : index
    %c0_17 = arith.constant 0 : index
    %22 = vector.load %arg6[%c0_16, %c0_17] : memref<1x10xf32, #tpu.memory_space<vmem>>, vector<1x10xf32>
    %23 = vector.broadcast %22 : vector<1x10xf32> to vector<2x10xf32>
    %24 = arith.addf %21, %23 : vector<2x10xf32>
    %c0_18 = arith.constant 0 : index
    %c0_19 = arith.constant 0 : index
    %25 = vector.load %arg7[%c0_18, %c0_19] : memref<2x10xf32, #tpu.memory_space<vmem>>, vector<2x10xf32>
    tpu.vector_store %arg7[%c0_18, %c0_19], %24 {strides = array<i32>} : memref<2x10xf32, #tpu.memory_space<vmem>>, vector<2x10xf32>,
    return
  }
}

</mosaic_0001>

<llo_original>
// kernel: custom_model_forward.1
$region0: #{custom_model_forward.1}
  #allocation0 [shape = 'u32[]', space=smem, size = 0x4, offset = 0x4, fixed_abs, tag = 'smem constant byte address 0x4 - core index']
  #allocation1 [shape = 'u32[144,128]{1,0:T(1,128)}', space=vmem, size = 0x12000, scoped, tag = 'internal scratch']
  %s0 = inlined_call_operand.vmem [shape: f32[36,512], index: 0, kind: input, shape index: {}]
  %s1 = inlined_call_operand.vmem [shape: f32[8,36], index: 1, kind: input, shape index: {}]
  %s2 = inlined_call_operand.vmem [shape: f32[8,1], index: 2, kind: input, shape index: {}]
  %s3 = inlined_call_operand.vmem [shape: bf16[2048,32], index: 3, kind: input, shape index: {}]
  %s4 = inlined_call_operand.vmem [shape: f32[1,32], index: 4, kind: input, shape index: {}]
  %s5 = inlined_call_operand.vmem [shape: f32[32,10], index: 5, kind: input, shape index: {}]
  %s6 = inlined_call_operand.vmem [shape: f32[1,10], index: 6, kind: input, shape index: {}]
  %s7 = inlined_call_operand.hbm [shape: f32[2,10], index: 7, kind: output, shape index: {0}]
  %s8 = inlined_call_operand.hbm [shape: f32[2,32], index: 8, kind: output, shape index: {1}]
  %9 = xla_tuple %s7, %s8
  %s10 = sld [smem:[#allocation0]]
  $region46: #{custom_model_forward.1} parent=0
    _
  %s12 = ssub.s32 1, %s10
  %s13 = scalar_select 0, %s12, %s10
  $region1: #{custom_model_forward.1} parent=0
    #allocation2 [shape = 'u8[1024]{0}', space=vmem, size = 0x400, scoped, tag = 'output window, operand 0, single buffered']
    #allocation3 [shape = 's32[1]{0}', space=sflag, size = 0x4, scoped, tag = 'scoped memory for custom_model_forward.1']
    #allocation4 [shape = 'u8[1024]{0}', space=vmem, size = 0x400, scoped, tag = 'output window, operand 1, single buffered']
    #allocation5 [shape = 's32[1]{0}', space=sflag, size = 0x4, scoped, tag = 'scoped memory for custom_model_forward.1']
    %14 = vsyncpa [#allocation3], 0
    %15 = vsyncpa [#allocation5], 0
    // Predicated region
    $region2: #{custom_model_forward.1} parent=1 // pred_check
      _
    $region3: #{custom_model_forward.1} parent=1 // pred_check_branch
      %17 = sbr.rel (0) target = $region5
    $region4: #{custom_model_forward.1} parent=1 // pred_region
      _
    $region5: #{custom_model_forward.1} parent=1 // pred_fallthru
      _
    // Predicated region
    $region6: #{custom_model_forward.1} parent=1 // pred_check
      _
    $region7: #{custom_model_forward.1} parent=1 // pred_check_branch
      %19 = sbr.rel (0) target = $region9
    $region8: #{custom_model_forward.1} parent=1 // pred_region
      _
    $region9: #{custom_model_forward.1} parent=1 // pred_fallthru
      _
    // Predicated region
    $region10: #{custom_model_forward.1} parent=1 // pred_check
      _
    $region11: #{custom_model_forward.1} parent=1 // pred_check_branch
      %21 = sbr.rel (0) target = $region13
    $region12: #{custom_model_forward.1} parent=1 // pred_region
      _
    $region13: #{custom_model_forward.1} parent=1 // pred_fallthru
      _
    // Predicated region
    $region14: #{custom_model_forward.1} parent=1 // pred_check
      _
    $region15: #{custom_model_forward.1} parent=1 // pred_check_branch
      %23 = sbr.rel (0) target = $region17
    $region16: #{custom_model_forward.1} parent=1 // pred_region
      _
    $region17: #{custom_model_forward.1} parent=1 // pred_fallthru
      _
    // Predicated region
    $region18: #{custom_model_forward.1} parent=1 // pred_check
      _
    $region19: #{custom_model_forward.1} parent=1 // pred_check_branch
      %25 = sbr.rel (0) target = $region21
    $region20: #{custom_model_forward.1} parent=1 // pred_region
      _
    $region21: #{custom_model_forward.1} parent=1 // pred_fallthru
      _
    // Predicated region
    $region22: #{custom_model_forward.1} parent=1 // pred_check
      _
    $region23: #{custom_model_forward.1} parent=1 // pred_check_branch
      %27 = sbr.rel (0) target = $region25
    $region24: #{custom_model_forward.1} parent=1 // pred_region
      _
    $region25: #{custom_model_forward.1} parent=1 // pred_fallthru
      _
    // Predicated region
    $region26: #{custom_model_forward.1} parent=1 // pred_check
      _
    $region27: #{custom_model_forward.1} parent=1 // pred_check_branch
      %29 = sbr.rel (0) target = $region29
    $region28: #{custom_model_forward.1} parent=1 // pred_region
      _
    $region29: #{custom_model_forward.1} parent=1 // pred_fallthru
      _
    %v31 = vld [vmem:[%s1] sm:$0xff]
    %v32 = vld [vmem:[%s0] sm:$0xff]
    %v33 = vld [vmem:[%s0 + $0x8] sm:$0xff]
    %v34 = vld [vmem:[%s0 + $0x10] sm:$0xff]
    %v35 = vld [vmem:[%s0 + $0x18] sm:$0xff]
    %v36 = vld [vmem:[%s0 + $0x20] sm:$0xff]
    %v37 = vld [vmem:[%s0 + $0x28] sm:$0xff]
    %v38 = vld [vmem:[%s0 + $0x30] sm:$0xff]
    %v39 = vld [vmem:[%s0 + $0x38] sm:$0xff]
    %v40 = vld [vmem:[%s0 + $0x40] sm:$0xff]
    %v41 = vld [vmem:[%s0 + $0x48] sm:$0xff]
    %v42 = vld [vmem:[%s0 + $0x50] sm:$0xff]
    %v43 = vld [vmem:[%s0 + $0x58] sm:$0xff]
    %v44 = vld [vmem:[%s0 + $0x60] sm:$0xff]
    %v45 = vld [vmem:[%s0 + $0x68] sm:$0xff]
    %v46 = vld [vmem:[%s0 + $0x70] sm:$0xff]
    %v47 = vld [vmem:[%s0 + $0x78] sm:$0xff]
    %v48 = vld [vmem:[%s0 + $0x80] sm:$0xf]
    %v49 = vld [vmem:[%s0 + $0x88] sm:$0xf]
    %v50 = vld [vmem:[%s0 + $0x90] sm:$0xf]
    %v51 = vld [vmem:[%s0 + $0x98] sm:$0xf]
    %v52 = vld [vmem:[%s2] sm:$0xff]
    %54 = vset.pattern.permute.xlu0 0
    %55 = vperm.xlu0 %54, %v52
    %v56 = vpop.permute.xlu0 %55
    %vm58 = vcmask 293888
    %v60 = vsel %vm58, %v31, 0
    %vm62 = vcmask 1043456
    %v64 = vsel %vm62, %v48, 0
    %v67 = vsel %vm62, %v49, 0
    %v70 = vsel %vm62, %v50, 0
    %v73 = vsel %vm62, %v51, 0
    %75 = vmatprep.subr.mxu0 %v33
    %76 = vmatpush1.msra.mxu0 %v32
    %77 = vmatprep.subr.mxu0 %v37
    %78 = vmatpush1.msra.mxu0 %v36
    %79 = vmatprep.subr.mxu0 %v41
    %80 = vmatpush1.msra.mxu0 %v40
    %81 = vmatprep.subr.mxu0 %v45
    %82 = vmatpush1.msra.mxu0 %v44
    %83 = vmatprep.subr.mxu0 %v67
    %84 = vmatpush1.msra.mxu0 %v64
    %85 = vmatprep.subr.mxu0 0.0
    %86 = vmatpush1.msra.mxu0 0.0
    %87 = vmatprep.subr.mxu0 0.0
    %88 = vmatpush1.msra.mxu0 0.0
    %89 = vmatprep.subr.mxu0 0.0
    %90 = vmatpush1.msra.mxu0 0.0
    %91 = vmatprep.subr.mxu0 0.0
    %92 = vmatpush1.msra.mxu0 0.0
    %93 = vmatprep.subr.mxu0 0.0
    %94 = vmatpush1.msra.mxu0 0.0
    %95 = vmatprep.subr.mxu0 0.0
    %96 = vmatpush1.msra.mxu0 0.0
    %97 = vmatprep.subr.mxu0 0.0
    %98 = vmatpush1.msra.mxu0 0.0
    %99 = vmatprep.subr.mxu0 0.0
    %100 = vmatpush1.msra.mxu0 0.0
    %101 = vmatprep.subr.mxu0 0.0
    %102 = vmatpush1.msra.mxu0 0.0
    %103 = vmatprep.subr.mxu0 0.0
    %104 = vmatpush1.msra.mxu0 0.0
    %105 = vmatprep.subr.mxu0 0.0
    %106 = vmatpush1.msra.mxu0 0.0
    %107 = vmatprep.subr.mxu0 0.0
    %108 = vmatpush1.msra.mxu0 0.0
    %109 = vmatprep.subr.mxu0 0.0
    %110 = vmatpush1.msra.mxu0 0.0
    %111 = vmatprep.subr.mxu0 0.0
    %112 = vmatpush1.msra.mxu0 0.0
    %113 = vmatprep.subr.mxu0 0.0
    %114 = vmatpush1.msra.mxu0 0.0
    %115 = vmatprep.subr.mxu0 0.0
    %116 = vmatpush1.msra.mxu0 0.0
    %117 = vmatprep.subr.mxu0 0.0
    %118 = vmatpush1.msra.mxu0 0.0
    %119 = vmatprep.subr.mxu0 0.0
    %120 = vmatpush1.msra.mxu0 0.0
    %121 = vmatprep.subr.mxu0 0.0
    %122 = vmatpush1.msra.mxu0 0.0
    %123 = vmatprep.subr.mxu0 0.0
    %124 = vmatpush1.msra.mxu0 0.0
    %125 = vmatprep.subr.mxu0 0.0
    %126 = vmatpush1.msra.mxu0 0.0
    %127 = vmatprep.subr.mxu0 0.0
    %128 = vmatpush1.msra.mxu0 0.0
    %129 = vmatprep.subr.mxu0 0.0
    %130 = vmatpush1.msra.mxu0 0.0
    %131 = vmatprep.subr.mxu0 0.0
    %132 = vmatpush1.msra.mxu0 0.0
    %133 = vmatprep.subr.mxu0 0.0
    %134 = vmatpush1.msra.mxu0 0.0
    %135 = vmatprep.subr.mxu0 0.0
    %136 = vmatpush1.msra.mxu0 0.0
    %137 = vmatprep.subr.mxu0 0.0
    %138 = vmatpush1.msra.mxu0 0.0
    %139 = vmatprep.mubr.f32.mxu0 0.0
    %140 = vmatmul.mubr.f32.gmra.mrb[0].mxu0 %v60
    %v141 = vpop.f32.mrb[0].mxu0
    %v142 = vadd.f32 %v56, %v141
    %v143 = vpop.f32.mrb[0].mxu0
    %v144 = vadd.f32 %v56, %v143
    %145 = vdwg.mxu0
    %146 = vmatprep.subr.mxu0 %v35
    %147 = vmatpush1.msra.mxu0 %v34
    %148 = vmatprep.subr.mxu0 %v39
    %149 = vmatpush1.msra.mxu0 %v38
    %150 = vmatprep.subr.mxu0 %v43
    %151 = vmatpush1.msra.mxu0 %v42
    %152 = vmatprep.subr.mxu0 %v47
    %153 = vmatpush1.msra.mxu0 %v46
    %154 = vmatprep.subr.mxu0 %v73
    %155 = vmatpush1.msra.mxu0 %v70
    %156 = vmatprep.subr.mxu0 0.0
    %157 = vmatpush1.msra.mxu0 0.0
    %158 = vmatprep.subr.mxu0 0.0
    %159 = vmatpush1.msra.mxu0 0.0
    %160 = vmatprep.subr.mxu0 0.0
    %161 = vmatpush1.msra.mxu0 0.0
    %162 = vmatprep.subr.mxu0 0.0
    %163 = vmatpush1.msra.mxu0 0.0
    %164 = vmatprep.subr.mxu0 0.0
    %165 = vmatpush1.msra.mxu0 0.0
    %166 = vmatprep.subr.mxu0 0.0
    %167 = vmatpush1.msra.mxu0 0.0
    %168 = vmatprep.subr.mxu0 0.0
    %169 = vmatpush1.msra.mxu0 0.0
    %170 = vmatprep.subr.mxu0 0.0
    %171 = vmatpush1.msra.mxu0 0.0
    %172 = vmatprep.subr.mxu0 0.0
    %173 = vmatpush1.msra.mxu0 0.0
    %174 = vmatprep.subr.mxu0 0.0
    %175 = vmatpush1.msra.mxu0 0.0
    %176 = vmatprep.subr.mxu0 0.0
    %177 = vmatpush1.msra.mxu0 0.0
    %178 = vmatprep.subr.mxu0 0.0
    %179 = vmatpush1.msra.mxu0 0.0
    %180 = vmatprep.subr.mxu0 0.0
    %181 = vmatpush1.msra.mxu0 0.0
    %182 = vmatprep.subr.mxu0 0.0
    %183 = vmatpush1.msra.mxu0 0.0
    %184 = vmatprep.subr.mxu0 0.0
    %185 = vmatpush1.msra.mxu0 0.0
    %186 = vmatprep.subr.mxu0 0.0
    %187 = vmatpush1.msra.mxu0 0.0
    %188 = vmatprep.subr.mxu0 0.0
    %189 = vmatpush1.msra.mxu0 0.0
    %190 = vmatprep.subr.mxu0 0.0
    %191 = vmatpush1.msra.mxu0 0.0
    %192 = vmatprep.subr.mxu0 0.0
    %193 = vmatpush1.msra.mxu0 0.0
    %194 = vmatprep.subr.mxu0 0.0
    %195 = vmatpush1.msra.mxu0 0.0
    %196 = vmatprep.subr.mxu0 0.0
    %197 = vmatpush1.msra.mxu0 0.0
    %198 = vmatprep.subr.mxu0 0.0
    %199 = vmatpush1.msra.mxu0 0.0
    %200 = vmatprep.subr.mxu0 0.0
    %201 = vmatpush1.msra.mxu0 0.0
    %202 = vmatprep.subr.mxu0 0.0
    %203 = vmatpush1.msra.mxu0 0.0
    %204 = vmatprep.subr.mxu0 0.0
    %205 = vmatpush1.msra.mxu0 0.0
    %206 = vmatprep.subr.mxu0 0.0
    %207 = vmatpush1.msra.mxu0 0.0
    %208 = vmatprep.subr.mxu0 0.0
    %209 = vmatpush1.msra.mxu0 0.0
    %210 = vmatprep.mubr.f32.mxu0 0.0
    %211 = vmatmul.mubr.f32.gmra.mrb[0].mxu0 %v60
    %v212 = vpop.f32.mrb[0].mxu0
    %v213 = vadd.f32 %v56, %v212
    %v214 = vpop.f32.mrb[0].mxu0
    %v215 = vadd.f32 %v56, %v214
    %216 = vdwg.mxu0
    %v217 = vmax.f32 %v142, 0.0
    %v218 = vmax.f32 %v144, 0.0
    %v219 = vmax.f32 %v213, 0.0
    %v220 = vmax.f32 %v215, 0.0
    %v223 = vcombine.low %v217, %v218
    %v224 = vcombine.high %v217, %v218
    %v228 = vunpack.c.l.s4 1935823168
    %v229 = vunpack.c.0.s8 %v228
    %v230 = vlaneseq
    %v231 = vshrl.u32 %v230, 7
    %v232 = vsub.s32 %v229, %v231
    %v233 = vrot.slane %v223, %v232
    %v235 = vunpack.c.l.s4 1935823168
    %v236 = vunpack.c.0.s8 %v235
    %v237 = vlaneseq
    %v238 = vshrl.u32 %v237, 7
    %v239 = vsub.s32 %v236, %v238
    %v240 = vrot.slane %v224, %v239
    %v243 = vcombine.low %v219, %v220
    %v244 = vcombine.high %v219, %v220
    %v248 = vunpack.c.l.s4 1935823168
    %v249 = vunpack.c.0.s8 %v248
    %v250 = vlaneseq
    %v251 = vshrl.u32 %v250, 7
    %v252 = vsub.s32 %v249, %v251
    %v253 = vrot.slane %v243, %v252
    %v255 = vunpack.c.l.s4 1935823168
    %v256 = vunpack.c.0.s8 %v255
    %v257 = vlaneseq
    %v258 = vshrl.u32 %v257, 7
    %v259 = vsub.s32 %v256, %v258
    %v260 = vrot.slane %v244, %v259
    %v263 = vlaneseq
    %v264 = vshrl.u32 %v263, 7
    %v265 = vsub.s32 0, %v264
    %v266 = vrot.slane %v233, %v265
    %v267 = vlaneseq
    %v268 = vshrl.u32 %v267, 7
    %v269 = vsub.s32 1, %v268
    %v270 = vrot.slane %v233, %v269
    %v271 = vlaneseq
    %v272 = vshrl.u32 %v271, 7
    %v273 = vsub.s32 2, %v272
    %v274 = vrot.slane %v233, %v273
    %v275 = vlaneseq
    %v276 = vshrl.u32 %v275, 7
    %v277 = vsub.s32 3, %v276
    %v278 = vrot.slane %v233, %v277
    %v279 = vlaneseq
    %v280 = vshrl.u32 %v279, 7
    %v281 = vsub.s32 4, %v280
    %v282 = vrot.slane %v233, %v281
    %v283 = vlaneseq
    %v284 = vshrl.u32 %v283, 7
    %v285 = vsub.s32 5, %v284
    %v286 = vrot.slane %v233, %v285
    %v287 = vlaneseq
    %v288 = vshrl.u32 %v287, 7
    %v289 = vsub.s32 6, %v288
    %v290 = vrot.slane %v233, %v289
    %v291 = vlaneseq
    %v292 = vshrl.u32 %v291, 7
    %v293 = vsub.s32 7, %v292
    %v294 = vrot.slane %v233, %v293
    %v295 = vlaneseq
    %v296 = vshrl.u32 %v295, 7
    %v297 = vsub.s32 0, %v296
    %v298 = vrot.slane %v240, %v297
    %v299 = vlaneseq
    %v300 = vshrl.u32 %v299, 7
    %v301 = vsub.s32 1, %v300
    %v302 = vrot.slane %v240, %v301
    %v303 = vlaneseq
    %v304 = vshrl.u32 %v303, 7
    %v305 = vsub.s32 2, %v304
    %v306 = vrot.slane %v240, %v305
    %v307 = vlaneseq
    %v308 = vshrl.u32 %v307, 7
    %v309 = vsub.s32 3, %v308
    %v310 = vrot.slane %v240, %v309
    %v311 = vlaneseq
    %v312 = vshrl.u32 %v311, 7
    %v313 = vsub.s32 4, %v312
    %v314 = vrot.slane %v240, %v313
    %v315 = vlaneseq
    %v316 = vshrl.u32 %v315, 7
    %v317 = vsub.s32 5, %v316
    %v318 = vrot.slane %v240, %v317
    %v319 = vlaneseq
    %v320 = vshrl.u32 %v319, 7
    %v321 = vsub.s32 6, %v320
    %v322 = vrot.slane %v240, %v321
    %v323 = vlaneseq
    %v324 = vshrl.u32 %v323, 7
    %v325 = vsub.s32 7, %v324
    %v326 = vrot.slane %v240, %v325
    %v345 = vlaneseq
    %v346 = vshrl.u32 %v345, 7
    %v347 = vsub.s32 0, %v346
    %v348 = vrot.slane %v253, %v347
    %v349 = vlaneseq
    %v350 = vshrl.u32 %v349, 7
    %v351 = vsub.s32 1, %v350
    %v352 = vrot.slane %v253, %v351
    %v353 = vlaneseq
    %v354 = vshrl.u32 %v353, 7
    %v355 = vsub.s32 2, %v354
    %v356 = vrot.slane %v253, %v355
    %v357 = vlaneseq
    %v358 = vshrl.u32 %v357, 7
    %v359 = vsub.s32 3, %v358
    %v360 = vrot.slane %v253, %v359
    %v361 = vlaneseq
    %v362 = vshrl.u32 %v361, 7
    %v363 = vsub.s32 4, %v362
    %v364 = vrot.slane %v253, %v363
    %v365 = vlaneseq
    %v366 = vshrl.u32 %v365, 7
    %v367 = vsub.s32 5, %v366
    %v368 = vrot.slane %v253, %v367
    %v369 = vlaneseq
    %v370 = vshrl.u32 %v369, 7
    %v371 = vsub.s32 6, %v370
    %v372 = vrot.slane %v253, %v371
    %v373 = vlaneseq
    %v374 = vshrl.u32 %v373, 7
    %v375 = vsub.s32 7, %v374
    %v376 = vrot.slane %v253, %v375
    %v377 = vlaneseq
    %v378 = vshrl.u32 %v377, 7
    %v379 = vsub.s32 0, %v378
    %v380 = vrot.slane %v260, %v379
    %v381 = vlaneseq
    %v382 = vshrl.u32 %v381, 7
    %v383 = vsub.s32 1, %v382
    %v384 = vrot.slane %v260, %v383
    %v385 = vlaneseq
    %v386 = vshrl.u32 %v385, 7
    %v387 = vsub.s32 2, %v386
    %v388 = vrot.slane %v260, %v387
    %v389 = vlaneseq
    %v390 = vshrl.u32 %v389, 7
    %v391 = vsub.s32 3, %v390
    %v392 = vrot.slane %v260, %v391
    %v393 = vlaneseq
    %v394 = vshrl.u32 %v393, 7
    %v395 = vsub.s32 4, %v394
    %v396 = vrot.slane %v260, %v395
    %v397 = vlaneseq
    %v398 = vshrl.u32 %v397, 7
    %v399 = vsub.s32 5, %v398
    %v400 = vrot.slane %v260, %v399
    %v401 = vlaneseq
    %v402 = vshrl.u32 %v401, 7
    %v403 = vsub.s32 6, %v402
    %v404 = vrot.slane %v260, %v403
    %v405 = vlaneseq
    %v406 = vshrl.u32 %v405, 7
    %v407 = vsub.s32 7, %v406
    %v408 = vrot.slane %v260, %v407
    %vm425 = vcmask 1040384
    %v426 = vsel %vm425, %v266, %v348
    %v427 = vsel %vm425, %v270, %v352
    %v428 = vsel %vm425, %v274, %v356
    %v429 = vsel %vm425, %v278, %v360
    %v430 = vsel %vm425, %v282, %v364
    %v431 = vsel %vm425, %v286, %v368
    %v432 = vsel %vm425, %v290, %v372
    %v433 = vsel %vm425, %v294, %v376
    %v434 = vsel %vm425, %v298, %v380
    %v435 = vsel %vm425, %v302, %v384
    %v436 = vsel %vm425, %v306, %v388
    %v437 = vsel %vm425, %v310, %v392
    %v438 = vsel %vm425, %v314, %v396
    %v439 = vsel %vm425, %v318, %v400
    %v440 = vsel %vm425, %v322, %v404
    %v441 = vsel %vm425, %v326, %v408
    %v442 = vpack.c.bf16 %v426, %v426
    %v443 = vpack.c.bf16 %v427, %v427
    %v444 = vpack.c.bf16 %v428, %v428
    %v445 = vpack.c.bf16 %v429, %v429
    %v446 = vpack.c.bf16 %v430, %v430
    %v447 = vpack.c.bf16 %v431, %v431
    %v448 = vpack.c.bf16 %v432, %v432
    %v449 = vpack.c.bf16 %v433, %v433
    %v450 = vpack.c.bf16 %v434, %v434
    %v451 = vpack.c.bf16 %v435, %v435
    %v452 = vpack.c.bf16 %v436, %v436
    %v453 = vpack.c.bf16 %v437, %v437
    %v454 = vpack.c.bf16 %v438, %v438
    %v455 = vpack.c.bf16 %v439, %v439
    %v456 = vpack.c.bf16 %v440, %v440
    %v457 = vpack.c.bf16 %v441, %v441
    %v458 = vld [vmem:[%s3] sm:$0xf]
    %v459 = vld [vmem:[%s3 + $0x4] sm:$0xf]
    %v460 = vld [vmem:[%s3 + $0x8] sm:$0xf]
    %v461 = vld [vmem:[%s3 + $0xc] sm:$0xf]
    %v462 = vld [vmem:[%s3 + $0x10] sm:$0xf]
    %v463 = vld [vmem:[%s3 + $0x14] sm:$0xf]
    %v464 = vld [vmem:[%s3 + $0x18] sm:$0xf]
    %v465 = vld [vmem:[%s3 + $0x1c] sm:$0xf]
    %v466 = vld [vmem:[%s3 + $0x20] sm:$0xf]
    %v467 = vld [vmem:[%s3 + $0x24] sm:$0xf]
    %v468 = vld [vmem:[%s3 + $0x28] sm:$0xf]
    %v469 = vld [vmem:[%s3 + $0x2c] sm:$0xf]
    %v470 = vld [vmem:[%s3 + $0x30] sm:$0xf]
    %v471 = vld [vmem:[%s3 + $0x34] sm:$0xf]
    %v472 = vld [vmem:[%s3 + $0x38] sm:$0xf]
    %v473 = vld [vmem:[%s3 + $0x3c] sm:$0xf]
    %v474 = vld [vmem:[%s3 + $0x40] sm:$0xf]
    %v475 = vld [vmem:[%s3 + $0x44] sm:$0xf]
    %v476 = vld [vmem:[%s3 + $0x48] sm:$0xf]
    %v477 = vld [vmem:[%s3 + $0x4c] sm:$0xf]
    %v478 = vld [vmem:[%s3 + $0x50] sm:$0xf]
    %v479 = vld [vmem:[%s3 + $0x54] sm:$0xf]
    %v480 = vld [vmem:[%s3 + $0x58] sm:$0xf]
    %v481 = vld [vmem:[%s3 + $0x5c] sm:$0xf]
    %v482 = vld [vmem:[%s3 + $0x60] sm:$0xf]
    %v483 = vld [vmem:[%s3 + $0x64] sm:$0xf]
    %v484 = vld [vmem:[%s3 + $0x68] sm:$0xf]
    %v485 = vld [vmem:[%s3 + $0x6c] sm:$0xf]
    %v486 = vld [vmem:[%s3 + $0x70] sm:$0xf]
    %v487 = vld [vmem:[%s3 + $0x74] sm:$0xf]
    %v488 = vld [vmem:[%s3 + $0x78] sm:$0xf]
    %v489 = vld [vmem:[%s3 + $0x7c] sm:$0xf]
    %v490 = vld [vmem:[%s3 + $0x80] sm:$0xf]
    %v491 = vld [vmem:[%s3 + $0x84] sm:$0xf]
    %v492 = vld [vmem:[%s3 + $0x88] sm:$0xf]
    %v493 = vld [vmem:[%s3 + $0x8c] sm:$0xf]
    %v494 = vld [vmem:[%s3 + $0x90] sm:$0xf]
    %v495 = vld [vmem:[%s3 + $0x94] sm:$0xf]
    %v496 = vld [vmem:[%s3 + $0x98] sm:$0xf]
    %v497 = vld [vmem:[%s3 + $0x9c] sm:$0xf]
    %v498 = vld [vmem:[%s3 + $0xa0] sm:$0xf]
    %v499 = vld [vmem:[%s3 + $0xa4] sm:$0xf]
    %v500 = vld [vmem:[%s3 + $0xa8] sm:$0xf]
    %v501 = vld [vmem:[%s3 + $0xac] sm:$0xf]
    %v502 = vld [vmem:[%s3 + $0xb0] sm:$0xf]
    %v503 = vld [vmem:[%s3 + $0xb4] sm:$0xf]
    %v504 = vld [vmem:[%s3 + $0xb8] sm:$0xf]
    %v505 = vld [vmem:[%s3 + $0xbc] sm:$0xf]
    %v506 = vld [vmem:[%s3 + $0xc0] sm:$0xf]
    %v507 = vld [vmem:[%s3 + $0xc4] sm:$0xf]
    %v508 = vld [vmem:[%s3 + $0xc8] sm:$0xf]
    %v509 = vld [vmem:[%s3 + $0xcc] sm:$0xf]
    %v510 = vld [vmem:[%s3 + $0xd0] sm:$0xf]
    %v511 = vld [vmem:[%s3 + $0xd4] sm:$0xf]
    %v512 = vld [vmem:[%s3 + $0xd8] sm:$0xf]
    %v513 = vld [vmem:[%s3 + $0xdc] sm:$0xf]
    %v514 = vld [vmem:[%s3 + $0xe0] sm:$0xf]
    %v515 = vld [vmem:[%s3 + $0xe4] sm:$0xf]
    %v516 = vld [vmem:[%s3 + $0xe8] sm:$0xf]
    %v517 = vld [vmem:[%s3 + $0xec] sm:$0xf]
    %v518 = vld [vmem:[%s3 + $0xf0] sm:$0xf]
    %v519 = vld [vmem:[%s3 + $0xf4] sm:$0xf]
    %v520 = vld [vmem:[%s3 + $0xf8] sm:$0xf]
    %v521 = vld [vmem:[%s3 + $0xfc] sm:$0xf]
    %v522 = vld [vmem:[%s3 + $0x100] sm:$0xf]
    %v523 = vld [vmem:[%s3 + $0x104] sm:$0xf]
    %v524 = vld [vmem:[%s3 + $0x108] sm:$0xf]
    %v525 = vld [vmem:[%s3 + $0x10c] sm:$0xf]
    %v526 = vld [vmem:[%s3 + $0x110] sm:$0xf]
    %v527 = vld [vmem:[%s3 + $0x114] sm:$0xf]
    %v528 = vld [vmem:[%s3 + $0x118] sm:$0xf]
    %v529 = vld [vmem:[%s3 + $0x11c] sm:$0xf]
    %v530 = vld [vmem:[%s3 + $0x120] sm:$0xf]
    %v531 = vld [vmem:[%s3 + $0x124] sm:$0xf]
    %v532 = vld [vmem:[%s3 + $0x128] sm:$0xf]
    %v533 = vld [vmem:[%s3 + $0x12c] sm:$0xf]
    %v534 = vld [vmem:[%s3 + $0x130] sm:$0xf]
    %v535 = vld [vmem:[%s3 + $0x134] sm:$0xf]
    %v536 = vld [vmem:[%s3 + $0x138] sm:$0xf]
    %v537 = vld [vmem:[%s3 + $0x13c] sm:$0xf]
    %v538 = vld [vmem:[%s3 + $0x140] sm:$0xf]
    %v539 = vld [vmem:[%s3 + $0x144] sm:$0xf]
    %v540 = vld [vmem:[%s3 + $0x148] sm:$0xf]
    %v541 = vld [vmem:[%s3 + $0x14c] sm:$0xf]
    %v542 = vld [vmem:[%s3 + $0x150] sm:$0xf]
    %v543 = vld [vmem:[%s3 + $0x154] sm:$0xf]
    %v544 = vld [vmem:[%s3 + $0x158] sm:$0xf]
    %v545 = vld [vmem:[%s3 + $0x15c] sm:$0xf]
    %v546 = vld [vmem:[%s3 + $0x160] sm:$0xf]
    %v547 = vld [vmem:[%s3 + $0x164] sm:$0xf]
    %v548 = vld [vmem:[%s3 + $0x168] sm:$0xf]
    %v549 = vld [vmem:[%s3 + $0x16c] sm:$0xf]
    %v550 = vld [vmem:[%s3 + $0x170] sm:$0xf]
    %v551 = vld [vmem:[%s3 + $0x174] sm:$0xf]
    %v552 = vld [vmem:[%s3 + $0x178] sm:$0xf]
    %v553 = vld [vmem:[%s3 + $0x17c] sm:$0xf]
    %v554 = vld [vmem:[%s3 + $0x180] sm:$0xf]
    %v555 = vld [vmem:[%s3 + $0x184] sm:$0xf]
    %v556 = vld [vmem:[%s3 + $0x188] sm:$0xf]
    %v557 = vld [vmem:[%s3 + $0x18c] sm:$0xf]
    %v558 = vld [vmem:[%s3 + $0x190] sm:$0xf]
    %v559 = vld [vmem:[%s3 + $0x194] sm:$0xf]
    %v560 = vld [vmem:[%s3 + $0x198] sm:$0xf]
    %v561 = vld [vmem:[%s3 + $0x19c] sm:$0xf]
    %v562 = vld [vmem:[%s3 + $0x1a0] sm:$0xf]
    %v563 = vld [vmem:[%s3 + $0x1a4] sm:$0xf]
    %v564 = vld [vmem:[%s3 + $0x1a8] sm:$0xf]
    %v565 = vld [vmem:[%s3 + $0x1ac] sm:$0xf]
    %v566 = vld [vmem:[%s3 + $0x1b0] sm:$0xf]
    %v567 = vld [vmem:[%s3 + $0x1b4] sm:$0xf]
    %v568 = vld [vmem:[%s3 + $0x1b8] sm:$0xf]
    %v569 = vld [vmem:[%s3 + $0x1bc] sm:$0xf]
    %v570 = vld [vmem:[%s3 + $0x1c0] sm:$0xf]
    %v571 = vld [vmem:[%s3 + $0x1c4] sm:$0xf]
    %v572 = vld [vmem:[%s3 + $0x1c8] sm:$0xf]
    %v573 = vld [vmem:[%s3 + $0x1cc] sm:$0xf]
    %v574 = vld [vmem:[%s3 + $0x1d0] sm:$0xf]
    %v575 = vld [vmem:[%s3 + $0x1d4] sm:$0xf]
    %v576 = vld [vmem:[%s3 + $0x1d8] sm:$0xf]
    %v577 = vld [vmem:[%s3 + $0x1dc] sm:$0xf]
    %v578 = vld [vmem:[%s3 + $0x1e0] sm:$0xf]
    %v579 = vld [vmem:[%s3 + $0x1e4] sm:$0xf]
    %v580 = vld [vmem:[%s3 + $0x1e8] sm:$0xf]
    %v581 = vld [vmem:[%s3 + $0x1ec] sm:$0xf]
    %v582 = vld [vmem:[%s3 + $0x1f0] sm:$0xf]
    %v583 = vld [vmem:[%s3 + $0x1f4] sm:$0xf]
    %v584 = vld [vmem:[%s3 + $0x1f8] sm:$0xf]
    %v585 = vld [vmem:[%s3 + $0x1fc] sm:$0xf]
    %v586 = vld [vmem:[%s3 + $0x200] sm:$0xf]
    %v587 = vld [vmem:[%s3 + $0x204] sm:$0xf]
    %v588 = vld [vmem:[%s3 + $0x208] sm:$0xf]
    %v589 = vld [vmem:[%s3 + $0x20c] sm:$0xf]
    %v590 = vld [vmem:[%s3 + $0x210] sm:$0xf]
    %v591 = vld [vmem:[%s3 + $0x214] sm:$0xf]
    %v592 = vld [vmem:[%s3 + $0x218] sm:$0xf]
    %v593 = vld [vmem:[%s3 + $0x21c] sm:$0xf]
    %v594 = vld [vmem:[%s3 + $0x220] sm:$0xf]
    %v595 = vld [vmem:[%s3 + $0x224] sm:$0xf]
    %v596 = vld [vmem:[%s3 + $0x228] sm:$0xf]
    %v597 = vld [vmem:[%s3 + $0x22c] sm:$0xf]
    %v598 = vld [vmem:[%s3 + $0x230] sm:$0xf]
    %v599 = vld [vmem:[%s3 + $0x234] sm:$0xf]
    %v600 = vld [vmem:[%s3 + $0x238] sm:$0xf]
    %v601 = vld [vmem:[%s3 + $0x23c] sm:$0xf]
    %v602 = vld [vmem:[%s3 + $0x240] sm:$0xf]
    %v603 = vld [vmem:[%s3 + $0x244] sm:$0xf]
    %v604 = vld [vmem:[%s3 + $0x248] sm:$0xf]
    %v605 = vld [vmem:[%s3 + $0x24c] sm:$0xf]
    %v606 = vld [vmem:[%s3 + $0x250] sm:$0xf]
    %v607 = vld [vmem:[%s3 + $0x254] sm:$0xf]
    %v608 = vld [vmem:[%s3 + $0x258] sm:$0xf]
    %v609 = vld [vmem:[%s3 + $0x25c] sm:$0xf]
    %v610 = vld [vmem:[%s3 + $0x260] sm:$0xf]
    %v611 = vld [vmem:[%s3 + $0x264] sm:$0xf]
    %v612 = vld [vmem:[%s3 + $0x268] sm:$0xf]
    %v613 = vld [vmem:[%s3 + $0x26c] sm:$0xf]
    %v614 = vld [vmem:[%s3 + $0x270] sm:$0xf]
    %v615 = vld [vmem:[%s3 + $0x274] sm:$0xf]
    %v616 = vld [vmem:[%s3 + $0x278] sm:$0xf]
    %v617 = vld [vmem:[%s3 + $0x27c] sm:$0xf]
    %v618 = vld [vmem:[%s3 + $0x280] sm:$0xf]
    %v619 = vld [vmem:[%s3 + $0x284] sm:$0xf]
    %v620 = vld [vmem:[%s3 + $0x288] sm:$0xf]
    %v621 = vld [vmem:[%s3 + $0x28c] sm:$0xf]
    %v622 = vld [vmem:[%s3 + $0x290] sm:$0xf]
    %v623 = vld [vmem:[%s3 + $0x294] sm:$0xf]
    %v624 = vld [vmem:[%s3 + $0x298] sm:$0xf]
    %v625 = vld [vmem:[%s3 + $0x29c] sm:$0xf]
    %v626 = vld [vmem:[%s3 + $0x2a0] sm:$0xf]
    %v627 = vld [vmem:[%s3 + $0x2a4] sm:$0xf]
    %v628 = vld [vmem:[%s3 + $0x2a8] sm:$0xf]
    %v629 = vld [vmem:[%s3 + $0x2ac] sm:$0xf]
    %v630 = vld [vmem:[%s3 + $0x2b0] sm:$0xf]
    %v631 = vld [vmem:[%s3 + $0x2b4] sm:$0xf]
    %v632 = vld [vmem:[%s3 + $0x2b8] sm:$0xf]
    %v633 = vld [vmem:[%s3 + $0x2bc] sm:$0xf]
    %v634 = vld [vmem:[%s3 + $0x2c0] sm:$0xf]
    %v635 = vld [vmem:[%s3 + $0x2c4] sm:$0xf]
    %v636 = vld [vmem:[%s3 + $0x2c8] sm:$0xf]
    %v637 = vld [vmem:[%s3 + $0x2cc] sm:$0xf]
    %v638 = vld [vmem:[%s3 + $0x2d0] sm:$0xf]
    %v639 = vld [vmem:[%s3 + $0x2d4] sm:$0xf]
    %v640 = vld [vmem:[%s3 + $0x2d8] sm:$0xf]
    %v641 = vld [vmem:[%s3 + $0x2dc] sm:$0xf]
    %v642 = vld [vmem:[%s3 + $0x2e0] sm:$0xf]
    %v643 = vld [vmem:[%s3 + $0x2e4] sm:$0xf]
    %v644 = vld [vmem:[%s3 + $0x2e8] sm:$0xf]
    %v645 = vld [vmem:[%s3 + $0x2ec] sm:$0xf]
    %v646 = vld [vmem:[%s3 + $0x2f0] sm:$0xf]
    %v647 = vld [vmem:[%s3 + $0x2f4] sm:$0xf]
    %v648 = vld [vmem:[%s3 + $0x2f8] sm:$0xf]
    %v649 = vld [vmem:[%s3 + $0x2fc] sm:$0xf]
    %v650 = vld [vmem:[%s3 + $0x300] sm:$0xf]
    %v651 = vld [vmem:[%s3 + $0x304] sm:$0xf]
    %v652 = vld [vmem:[%s3 + $0x308] sm:$0xf]
    %v653 = vld [vmem:[%s3 + $0x30c] sm:$0xf]
    %v654 = vld [vmem:[%s3 + $0x310] sm:$0xf]
    %v655 = vld [vmem:[%s3 + $0x314] sm:$0xf]
    %v656 = vld [vmem:[%s3 + $0x318] sm:$0xf]
    %v657 = vld [vmem:[%s3 + $0x31c] sm:$0xf]
    %v658 = vld [vmem:[%s3 + $0x320] sm:$0xf]
    %v659 = vld [vmem:[%s3 + $0x324] sm:$0xf]
    %v660 = vld [vmem:[%s3 + $0x328] sm:$0xf]
    %v661 = vld [vmem:[%s3 + $0x32c] sm:$0xf]
    %v662 = vld [vmem:[%s3 + $0x330] sm:$0xf]
    %v663 = vld [vmem:[%s3 + $0x334] sm:$0xf]
    %v664 = vld [vmem:[%s3 + $0x338] sm:$0xf]
    %v665 = vld [vmem:[%s3 + $0x33c] sm:$0xf]
    %v666 = vld [vmem:[%s3 + $0x340] sm:$0xf]
    %v667 = vld [vmem:[%s3 + $0x344] sm:$0xf]
    %v668 = vld [vmem:[%s3 + $0x348] sm:$0xf]
    %v669 = vld [vmem:[%s3 + $0x34c] sm:$0xf]
    %v670 = vld [vmem:[%s3 + $0x350] sm:$0xf]
    %v671 = vld [vmem:[%s3 + $0x354] sm:$0xf]
    %v672 = vld [vmem:[%s3 + $0x358] sm:$0xf]
    %v673 = vld [vmem:[%s3 + $0x35c] sm:$0xf]
    %v674 = vld [vmem:[%s3 + $0x360] sm:$0xf]
    %v675 = vld [vmem:[%s3 + $0x364] sm:$0xf]
    %v676 = vld [vmem:[%s3 + $0x368] sm:$0xf]
    %v677 = vld [vmem:[%s3 + $0x36c] sm:$0xf]
    %v678 = vld [vmem:[%s3 + $0x370] sm:$0xf]
    %v679 = vld [vmem:[%s3 + $0x374] sm:$0xf]
    %v680 = vld [vmem:[%s3 + $0x378] sm:$0xf]
    %v681 = vld [vmem:[%s3 + $0x37c] sm:$0xf]
    %v682 = vld [vmem:[%s3 + $0x380] sm:$0xf]
    %v683 = vld [vmem:[%s3 + $0x384] sm:$0xf]
    %v684 = vld [vmem:[%s3 + $0x388] sm:$0xf]
    %v685 = vld [vmem:[%s3 + $0x38c] sm:$0xf]
    %v686 = vld [vmem:[%s3 + $0x390] sm:$0xf]
    %v687 = vld [vmem:[%s3 + $0x394] sm:$0xf]
    %v688 = vld [vmem:[%s3 + $0x398] sm:$0xf]
    %v689 = vld [vmem:[%s3 + $0x39c] sm:$0xf]
    %v690 = vld [vmem:[%s3 + $0x3a0] sm:$0xf]
    %v691 = vld [vmem:[%s3 + $0x3a4] sm:$0xf]
    %v692 = vld [vmem:[%s3 + $0x3a8] sm:$0xf]
    %v693 = vld [vmem:[%s3 + $0x3ac] sm:$0xf]
    %v694 = vld [vmem:[%s3 + $0x3b0] sm:$0xf]
    %v695 = vld [vmem:[%s3 + $0x3b4] sm:$0xf]
    %v696 = vld [vmem:[%s3 + $0x3b8] sm:$0xf]
    %v697 = vld [vmem:[%s3 + $0x3bc] sm:$0xf]
    %v698 = vld [vmem:[%s3 + $0x3c0] sm:$0xf]
    %v699 = vld [vmem:[%s3 + $0x3c4] sm:$0xf]
    %v700 = vld [vmem:[%s3 + $0x3c8] sm:$0xf]
    %v701 = vld [vmem:[%s3 + $0x3cc] sm:$0xf]
    %v702 = vld [vmem:[%s3 + $0x3d0] sm:$0xf]
    %v703 = vld [vmem:[%s3 + $0x3d4] sm:$0xf]
    %v704 = vld [vmem:[%s3 + $0x3d8] sm:$0xf]
    %v705 = vld [vmem:[%s3 + $0x3dc] sm:$0xf]
    %v706 = vld [vmem:[%s3 + $0x3e0] sm:$0xf]
    %v707 = vld [vmem:[%s3 + $0x3e4] sm:$0xf]
    %v708 = vld [vmem:[%s3 + $0x3e8] sm:$0xf]
    %v709 = vld [vmem:[%s3 + $0x3ec] sm:$0xf]
    %v710 = vld [vmem:[%s3 + $0x3f0] sm:$0xf]
    %v711 = vld [vmem:[%s3 + $0x3f4] sm:$0xf]
    %v712 = vld [vmem:[%s3 + $0x3f8] sm:$0xf]
    %v713 = vld [vmem:[%s3 + $0x3fc] sm:$0xf]
    %v714 = vld [vmem:[%s4] sm:$0x1]
    %v716 = vlaneseq
    %v717 = vshrl.u32 %v716, 7
    %v718 = vsub.s32 0, %v717
    %v719 = vrot.slane %v714, %v718
    %v977 = vunpack.c.l.b16 %v458
    %v978 = vunpack.c.l.b16 %v459
    %v979 = vunpack.c.l.b16 %v460
    %v980 = vunpack.c.l.b16 %v461
    %v981 = vunpack.c.l.b16 %v462
    %v982 = vunpack.c.l.b16 %v463
    %v983 = vunpack.c.l.b16 %v464
    %v984 = vunpack.c.l.b16 %v465
    %v985 = vunpack.c.l.b16 %v466
    %v986 = vunpack.c.l.b16 %v467
    %v987 = vunpack.c.l.b16 %v468
    %v988 = vunpack.c.l.b16 %v469
    %v989 = vunpack.c.l.b16 %v470
    %v990 = vunpack.c.l.b16 %v471
    %v991 = vunpack.c.l.b16 %v472
    %v992 = vunpack.c.l.b16 %v473
    %v993 = vunpack.c.l.b16 %v474
    %v994 = vunpack.c.l.b16 %v475
    %v995 = vunpack.c.l.b16 %v476
    %v996 = vunpack.c.l.b16 %v477
    %v997 = vunpack.c.l.b16 %v478
    %v998 = vunpack.c.l.b16 %v479
    %v999 = vunpack.c.l.b16 %v480
    %v1000 = vunpack.c.l.b16 %v481
    %v1001 = vunpack.c.l.b16 %v482
    %v1002 = vunpack.c.l.b16 %v483
    %v1003 = vunpack.c.l.b16 %v484
    %v1004 = vunpack.c.l.b16 %v485
    %v1005 = vunpack.c.l.b16 %v486
    %v1006 = vunpack.c.l.b16 %v487
    %v1007 = vunpack.c.l.b16 %v488
    %v1008 = vunpack.c.l.b16 %v489
    %v1009 = vunpack.c.l.b16 %v490
    %v1010 = vunpack.c.l.b16 %v491
    %v1011 = vunpack.c.l.b16 %v492
    %v1012 = vunpack.c.l.b16 %v493
    %v1013 = vunpack.c.l.b16 %v494
    %v1014 = vunpack.c.l.b16 %v495
    %v1015 = vunpack.c.l.b16 %v496
    %v1016 = vunpack.c.l.b16 %v497
    %v1017 = vunpack.c.l.b16 %v498
    %v1018 = vunpack.c.l.b16 %v499
    %v1019 = vunpack.c.l.b16 %v500
    %v1020 = vunpack.c.l.b16 %v501
    %v1021 = vunpack.c.l.b16 %v502
    %v1022 = vunpack.c.l.b16 %v503
    %v1023 = vunpack.c.l.b16 %v504
    %v1024 = vunpack.c.l.b16 %v505
    %v1025 = vunpack.c.l.b16 %v506
    %v1026 = vunpack.c.l.b16 %v507
    %v1027 = vunpack.c.l.b16 %v508
    %v1028 = vunpack.c.l.b16 %v509
    %v1029 = vunpack.c.l.b16 %v510
    %v1030 = vunpack.c.l.b16 %v511
    %v1031 = vunpack.c.l.b16 %v512
    %v1032 = vunpack.c.l.b16 %v513
    %v1033 = vunpack.c.l.b16 %v514
    %v1034 = vunpack.c.l.b16 %v515
    %v1035 = vunpack.c.l.b16 %v516
    %v1036 = vunpack.c.l.b16 %v517
    %v1037 = vunpack.c.l.b16 %v518
    %v1038 = vunpack.c.l.b16 %v519
    %v1039 = vunpack.c.l.b16 %v520
    %v1040 = vunpack.c.l.b16 %v521
    %v1041 = vunpack.c.l.b16 %v522
    %v1042 = vunpack.c.l.b16 %v523
    %v1043 = vunpack.c.l.b16 %v524
    %v1044 = vunpack.c.l.b16 %v525
    %v1045 = vunpack.c.l.b16 %v526
    %v1046 = vunpack.c.l.b16 %v527
    %v1047 = vunpack.c.l.b16 %v528
    %v1048 = vunpack.c.l.b16 %v529
    %v1049 = vunpack.c.l.b16 %v530
    %v1050 = vunpack.c.l.b16 %v531
    %v1051 = vunpack.c.l.b16 %v532
    %v1052 = vunpack.c.l.b16 %v533
    %v1053 = vunpack.c.l.b16 %v534
    %v1054 = vunpack.c.l.b16 %v535
    %v1055 = vunpack.c.l.b16 %v536
    %v1056 = vunpack.c.l.b16 %v537
    %v1057 = vunpack.c.l.b16 %v538
    %v1058 = vunpack.c.l.b16 %v539
    %v1059 = vunpack.c.l.b16 %v540
    %v1060 = vunpack.c.l.b16 %v541
    %v1061 = vunpack.c.l.b16 %v542
    %v1062 = vunpack.c.l.b16 %v543
    %v1063 = vunpack.c.l.b16 %v544
    %v1064 = vunpack.c.l.b16 %v545
    %v1065 = vunpack.c.l.b16 %v546
    %v1066 = vunpack.c.l.b16 %v547
    %v1067 = vunpack.c.l.b16 %v548
    %v1068 = vunpack.c.l.b16 %v549
    %v1069 = vunpack.c.l.b16 %v550
    %v1070 = vunpack.c.l.b16 %v551
    %v1071 = vunpack.c.l.b16 %v552
    %v1072 = vunpack.c.l.b16 %v553
    %v1073 = vunpack.c.l.b16 %v554
    %v1074 = vunpack.c.l.b16 %v555
    %v1075 = vunpack.c.l.b16 %v556
    %v1076 = vunpack.c.l.b16 %v557
    %v1077 = vunpack.c.l.b16 %v558
    %v1078 = vunpack.c.l.b16 %v559
    %v1079 = vunpack.c.l.b16 %v560
    %v1080 = vunpack.c.l.b16 %v561
    %v1081 = vunpack.c.l.b16 %v562
    %v1082 = vunpack.c.l.b16 %v563
    %v1083 = vunpack.c.l.b16 %v564
    %v1084 = vunpack.c.l.b16 %v565
    %v1085 = vunpack.c.l.b16 %v566
    %v1086 = vunpack.c.l.b16 %v567
    %v1087 = vunpack.c.l.b16 %v568
    %v1088 = vunpack.c.l.b16 %v569
    %v1089 = vunpack.c.l.b16 %v570
    %v1090 = vunpack.c.l.b16 %v571
    %v1091 = vunpack.c.l.b16 %v572
    %v1092 = vunpack.c.l.b16 %v573
    %v1093 = vunpack.c.l.b16 %v574
    %v1094 = vunpack.c.l.b16 %v575
    %v1095 = vunpack.c.l.b16 %v576
    %v1096 = vunpack.c.l.b16 %v577
    %v1097 = vunpack.c.l.b16 %v578
    %v1098 = vunpack.c.l.b16 %v579
    %v1099 = vunpack.c.l.b16 %v580
    %v1100 = vunpack.c.l.b16 %v581
    %v1101 = vunpack.c.l.b16 %v582
    %v1102 = vunpack.c.l.b16 %v583
    %v1103 = vunpack.c.l.b16 %v584
    %v1104 = vunpack.c.l.b16 %v585
    %v1105 = vunpack.c.l.b16 %v586
    %v1106 = vunpack.c.l.b16 %v587
    %v1107 = vunpack.c.l.b16 %v588
    %v1108 = vunpack.c.l.b16 %v589
    %v1109 = vunpack.c.l.b16 %v590
    %v1110 = vunpack.c.l.b16 %v591
    %v1111 = vunpack.c.l.b16 %v592
    %v1112 = vunpack.c.l.b16 %v593
    %v1113 = vunpack.c.l.b16 %v594
    %v1114 = vunpack.c.l.b16 %v595
    %v1115 = vunpack.c.l.b16 %v596
    %v1116 = vunpack.c.l.b16 %v597
    %v1117 = vunpack.c.l.b16 %v598
    %v1118 = vunpack.c.l.b16 %v599
    %v1119 = vunpack.c.l.b16 %v600
    %v1120 = vunpack.c.l.b16 %v601
    %v1121 = vunpack.c.l.b16 %v602
    %v1122 = vunpack.c.l.b16 %v603
    %v1123 = vunpack.c.l.b16 %v604
    %v1124 = vunpack.c.l.b16 %v605
    %v1125 = vunpack.c.l.b16 %v606
    %v1126 = vunpack.c.l.b16 %v607
    %v1127 = vunpack.c.l.b16 %v608
    %v1128 = vunpack.c.l.b16 %v609
    %v1129 = vunpack.c.l.b16 %v610
    %v1130 = vunpack.c.l.b16 %v611
    %v1131 = vunpack.c.l.b16 %v612
    %v1132 = vunpack.c.l.b16 %v613
    %v1133 = vunpack.c.l.b16 %v614
    %v1134 = vunpack.c.l.b16 %v615
    %v1135 = vunpack.c.l.b16 %v616
    %v1136 = vunpack.c.l.b16 %v617
    %v1137 = vunpack.c.l.b16 %v618
    %v1138 = vunpack.c.l.b16 %v619
    %v1139 = vunpack.c.l.b16 %v620
    %v1140 = vunpack.c.l.b16 %v621
    %v1141 = vunpack.c.l.b16 %v622
    %v1142 = vunpack.c.l.b16 %v623
    %v1143 = vunpack.c.l.b16 %v624
    %v1144 = vunpack.c.l.b16 %v625
    %v1145 = vunpack.c.l.b16 %v626
    %v1146 = vunpack.c.l.b16 %v627
    %v1147 = vunpack.c.l.b16 %v628
    %v1148 = vunpack.c.l.b16 %v629
    %v1149 = vunpack.c.l.b16 %v630
    %v1150 = vunpack.c.l.b16 %v631
    %v1151 = vunpack.c.l.b16 %v632
    %v1152 = vunpack.c.l.b16 %v633
    %v1153 = vunpack.c.l.b16 %v634
    %v1154 = vunpack.c.l.b16 %v635
    %v1155 = vunpack.c.l.b16 %v636
    %v1156 = vunpack.c.l.b16 %v637
    %v1157 = vunpack.c.l.b16 %v638
    %v1158 = vunpack.c.l.b16 %v639
    %v1159 = vunpack.c.l.b16 %v640
    %v1160 = vunpack.c.l.b16 %v641
    %v1161 = vunpack.c.l.b16 %v642
    %v1162 = vunpack.c.l.b16 %v643
    %v1163 = vunpack.c.l.b16 %v644
    %v1164 = vunpack.c.l.b16 %v645
    %v1165 = vunpack.c.l.b16 %v646
    %v1166 = vunpack.c.l.b16 %v647
    %v1167 = vunpack.c.l.b16 %v648
    %v1168 = vunpack.c.l.b16 %v649
    %v1169 = vunpack.c.l.b16 %v650
    %v1170 = vunpack.c.l.b16 %v651
    %v1171 = vunpack.c.l.b16 %v652
    %v1172 = vunpack.c.l.b16 %v653
    %v1173 = vunpack.c.l.b16 %v654
    %v1174 = vunpack.c.l.b16 %v655
    %v1175 = vunpack.c.l.b16 %v656
    %v1176 = vunpack.c.l.b16 %v657
    %v1177 = vunpack.c.l.b16 %v658
    %v1178 = vunpack.c.l.b16 %v659
    %v1179 = vunpack.c.l.b16 %v660
    %v1180 = vunpack.c.l.b16 %v661
    %v1181 = vunpack.c.l.b16 %v662
    %v1182 = vunpack.c.l.b16 %v663
    %v1183 = vunpack.c.l.b16 %v664
    %v1184 = vunpack.c.l.b16 %v665
    %v1185 = vunpack.c.l.b16 %v666
    %v1186 = vunpack.c.l.b16 %v667
    %v1187 = vunpack.c.l.b16 %v668
    %v1188 = vunpack.c.l.b16 %v669
    %v1189 = vunpack.c.l.b16 %v670
    %v1190 = vunpack.c.l.b16 %v671
    %v1191 = vunpack.c.l.b16 %v672
    %v1192 = vunpack.c.l.b16 %v673
    %v1193 = vunpack.c.l.b16 %v674
    %v1194 = vunpack.c.l.b16 %v675
    %v1195 = vunpack.c.l.b16 %v676
    %v1196 = vunpack.c.l.b16 %v677
    %v1197 = vunpack.c.l.b16 %v678
    %v1198 = vunpack.c.l.b16 %v679
    %v1199 = vunpack.c.l.b16 %v680
    %v1200 = vunpack.c.l.b16 %v681
    %v1201 = vunpack.c.l.b16 %v682
    %v1202 = vunpack.c.l.b16 %v683
    %v1203 = vunpack.c.l.b16 %v684
    %v1204 = vunpack.c.l.b16 %v685
    %v1205 = vunpack.c.l.b16 %v686
    %v1206 = vunpack.c.l.b16 %v687
    %v1207 = vunpack.c.l.b16 %v688
    %v1208 = vunpack.c.l.b16 %v689
    %v1209 = vunpack.c.l.b16 %v690
    %v1210 = vunpack.c.l.b16 %v691
    %v1211 = vunpack.c.l.b16 %v692
    %v1212 = vunpack.c.l.b16 %v693
    %v1213 = vunpack.c.l.b16 %v694
    %v1214 = vunpack.c.l.b16 %v695
    %v1215 = vunpack.c.l.b16 %v696
    %v1216 = vunpack.c.l.b16 %v697
    %v1217 = vunpack.c.l.b16 %v698
    %v1218 = vunpack.c.l.b16 %v699
    %v1219 = vunpack.c.l.b16 %v700
    %v1220 = vunpack.c.l.b16 %v701
    %v1221 = vunpack.c.l.b16 %v702
    %v1222 = vunpack.c.l.b16 %v703
    %v1223 = vunpack.c.l.b16 %v704
    %v1224 = vunpack.c.l.b16 %v705
    %v1225 = vunpack.c.l.b16 %v706
    %v1226 = vunpack.c.l.b16 %v707
    %v1227 = vunpack.c.l.b16 %v708
    %v1228 = vunpack.c.l.b16 %v709
    %v1229 = vunpack.c.l.b16 %v710
    %v1230 = vunpack.c.l.b16 %v711
    %v1231 = vunpack.c.l.b16 %v712
    %v1232 = vunpack.c.l.b16 %v713
    %v1233 = vpack.c.b16 %v978, %v977
    %v1234 = vpack.c.b16 %v980, %v979
    %v1235 = vpack.c.b16 %v982, %v981
    %v1236 = vpack.c.b16 %v984, %v983
    %v1237 = vpack.c.b16 %v986, %v985
    %v1238 = vpack.c.b16 %v988, %v987
    %v1239 = vpack.c.b16 %v990, %v989
    %v1240 = vpack.c.b16 %v992, %v991
    %v1241 = vpack.c.b16 %v994, %v993
    %v1242 = vpack.c.b16 %v996, %v995
    %v1243 = vpack.c.b16 %v998, %v997
    %v1244 = vpack.c.b16 %v1000, %v999
    %v1245 = vpack.c.b16 %v1002, %v1001
    %v1246 = vpack.c.b16 %v1004, %v1003
    %v1247 = vpack.c.b16 %v1006, %v1005
    %v1248 = vpack.c.b16 %v1008, %v1007
    %v1249 = vpack.c.b16 %v1010, %v1009
    %v1250 = vpack.c.b16 %v1012, %v1011
    %v1251 = vpack.c.b16 %v1014, %v1013
    %v1252 = vpack.c.b16 %v1016, %v1015
    %v1253 = vpack.c.b16 %v1018, %v1017
    %v1254 = vpack.c.b16 %v1020, %v1019
    %v1255 = vpack.c.b16 %v1022, %v1021
    %v1256 = vpack.c.b16 %v1024, %v1023
    %v1257 = vpack.c.b16 %v1026, %v1025
    %v1258 = vpack.c.b16 %v1028, %v1027
    %v1259 = vpack.c.b16 %v1030, %v1029
    %v1260 = vpack.c.b16 %v1032, %v1031
    %v1261 = vpack.c.b16 %v1034, %v1033
    %v1262 = vpack.c.b16 %v1036, %v1035
    %v1263 = vpack.c.b16 %v1038, %v1037
    %v1264 = vpack.c.b16 %v1040, %v1039
    %v1265 = vpack.c.b16 %v1042, %v1041
    %v1266 = vpack.c.b16 %v1044, %v1043
    %v1267 = vpack.c.b16 %v1046, %v1045
    %v1268 = vpack.c.b16 %v1048, %v1047
    %v1269 = vpack.c.b16 %v1050, %v1049
    %v1270 = vpack.c.b16 %v1052, %v1051
    %v1271 = vpack.c.b16 %v1054, %v1053
    %v1272 = vpack.c.b16 %v1056, %v1055
    %v1273 = vpack.c.b16 %v1058, %v1057
    %v1274 = vpack.c.b16 %v1060, %v1059
    %v1275 = vpack.c.b16 %v1062, %v1061
    %v1276 = vpack.c.b16 %v1064, %v1063
    %v1277 = vpack.c.b16 %v1066, %v1065
    %v1278 = vpack.c.b16 %v1068, %v1067
    %v1279 = vpack.c.b16 %v1070, %v1069
    %v1280 = vpack.c.b16 %v1072, %v1071
    %v1281 = vpack.c.b16 %v1074, %v1073
    %v1282 = vpack.c.b16 %v1076, %v1075
    %v1283 = vpack.c.b16 %v1078, %v1077
    %v1284 = vpack.c.b16 %v1080, %v1079
    %v1285 = vpack.c.b16 %v1082, %v1081
    %v1286 = vpack.c.b16 %v1084, %v1083
    %v1287 = vpack.c.b16 %v1086, %v1085
    %v1288 = vpack.c.b16 %v1088, %v1087
    %v1289 = vpack.c.b16 %v1090, %v1089
    %v1290 = vpack.c.b16 %v1092, %v1091
    %v1291 = vpack.c.b16 %v1094, %v1093
    %v1292 = vpack.c.b16 %v1096, %v1095
    %v1293 = vpack.c.b16 %v1098, %v1097
    %v1294 = vpack.c.b16 %v1100, %v1099
    %v1295 = vpack.c.b16 %v1102, %v1101
    %v1296 = vpack.c.b16 %v1104, %v1103
    %v1297 = vpack.c.b16 %v1106, %v1105
    %v1298 = vpack.c.b16 %v1108, %v1107
    %v1299 = vpack.c.b16 %v1110, %v1109
    %v1300 = vpack.c.b16 %v1112, %v1111
    %v1301 = vpack.c.b16 %v1114, %v1113
    %v1302 = vpack.c.b16 %v1116, %v1115
    %v1303 = vpack.c.b16 %v1118, %v1117
    %v1304 = vpack.c.b16 %v1120, %v1119
    %v1305 = vpack.c.b16 %v1122, %v1121
    %v1306 = vpack.c.b16 %v1124, %v1123
    %v1307 = vpack.c.b16 %v1126, %v1125
    %v1308 = vpack.c.b16 %v1128, %v1127
    %v1309 = vpack.c.b16 %v1130, %v1129
    %v1310 = vpack.c.b16 %v1132, %v1131
    %v1311 = vpack.c.b16 %v1134, %v1133
    %v1312 = vpack.c.b16 %v1136, %v1135
    %v1313 = vpack.c.b16 %v1138, %v1137
    %v1314 = vpack.c.b16 %v1140, %v1139
    %v1315 = vpack.c.b16 %v1142, %v1141
    %v1316 = vpack.c.b16 %v1144, %v1143
    %v1317 = vpack.c.b16 %v1146, %v1145
    %v1318 = vpack.c.b16 %v1148, %v1147
    %v1319 = vpack.c.b16 %v1150, %v1149
    %v1320 = vpack.c.b16 %v1152, %v1151
    %v1321 = vpack.c.b16 %v1154, %v1153
    %v1322 = vpack.c.b16 %v1156, %v1155
    %v1323 = vpack.c.b16 %v1158, %v1157
    %v1324 = vpack.c.b16 %v1160, %v1159
    %v1325 = vpack.c.b16 %v1162, %v1161
    %v1326 = vpack.c.b16 %v1164, %v1163
    %v1327 = vpack.c.b16 %v1166, %v1165
    %v1328 = vpack.c.b16 %v1168, %v1167
    %v1329 = vpack.c.b16 %v1170, %v1169
    %v1330 = vpack.c.b16 %v1172, %v1171
    %v1331 = vpack.c.b16 %v1174, %v1173
    %v1332 = vpack.c.b16 %v1176, %v1175
    %v1333 = vpack.c.b16 %v1178, %v1177
    %v1334 = vpack.c.b16 %v1180, %v1179
    %v1335 = vpack.c.b16 %v1182, %v1181
    %v1336 = vpack.c.b16 %v1184, %v1183
    %v1337 = vpack.c.b16 %v1186, %v1185
    %v1338 = vpack.c.b16 %v1188, %v1187
    %v1339 = vpack.c.b16 %v1190, %v1189
    %v1340 = vpack.c.b16 %v1192, %v1191
    %v1341 = vpack.c.b16 %v1194, %v1193
    %v1342 = vpack.c.b16 %v1196, %v1195
    %v1343 = vpack.c.b16 %v1198, %v1197
    %v1344 = vpack.c.b16 %v1200, %v1199
    %v1345 = vpack.c.b16 %v1202, %v1201
    %v1346 = vpack.c.b16 %v1204, %v1203
    %v1347 = vpack.c.b16 %v1206, %v1205
    %v1348 = vpack.c.b16 %v1208, %v1207
    %v1349 = vpack.c.b16 %v1210, %v1209
    %v1350 = vpack.c.b16 %v1212, %v1211
    %v1351 = vpack.c.b16 %v1214, %v1213
    %v1352 = vpack.c.b16 %v1216, %v1215
    %v1353 = vpack.c.b16 %v1218, %v1217
    %v1354 = vpack.c.b16 %v1220, %v1219
    %v1355 = vpack.c.b16 %v1222, %v1221
    %v1356 = vpack.c.b16 %v1224, %v1223
    %v1357 = vpack.c.b16 %v1226, %v1225
    %v1358 = vpack.c.b16 %v1228, %v1227
    %v1359 = vpack.c.b16 %v1230, %v1229
    %v1360 = vpack.c.b16 %v1232, %v1231
    %1489 = vmatprep.subr.bf16.mxu0 0
    %1490 = vmatpush1.bf16.msra.mxu0 %v1233
    %1491 = vmatprep.subr.bf16.mxu0 0
    %1492 = vmatpush1.bf16.msra.mxu0 %v1234
    %1493 = vmatprep.subr.bf16.mxu0 0
    %1494 = vmatpush1.bf16.msra.mxu0 %v1235
    %1495 = vmatprep.subr.bf16.mxu0 0
    %1496 = vmatpush1.bf16.msra.mxu0 %v1236
    %1497 = vmatprep.subr.bf16.mxu0 0
    %1498 = vmatpush1.bf16.msra.mxu0 %v1237
    %1499 = vmatprep.subr.bf16.mxu0 0
    %1500 = vmatpush1.bf16.msra.mxu0 %v1238
    %1501 = vmatprep.subr.bf16.mxu0 0
    %1502 = vmatpush1.bf16.msra.mxu0 %v1239
    %1503 = vmatprep.subr.bf16.mxu0 0
    %1504 = vmatpush1.bf16.msra.mxu0 %v1240
    %1505 = vmatprep.subr.bf16.mxu0 0
    %1506 = vmatpush1.bf16.msra.mxu0 %v1241
    %1507 = vmatprep.subr.bf16.mxu0 0
    %1508 = vmatpush1.bf16.msra.mxu0 %v1242
    %1509 = vmatprep.subr.bf16.mxu0 0
    %1510 = vmatpush1.bf16.msra.mxu0 %v1243
    %1511 = vmatprep.subr.bf16.mxu0 0
    %1512 = vmatpush1.bf16.msra.mxu0 %v1244
    %1513 = vmatprep.subr.bf16.mxu0 0
    %1514 = vmatpush1.bf16.msra.mxu0 %v1245
    %1515 = vmatprep.subr.bf16.mxu0 0
    %1516 = vmatpush1.bf16.msra.mxu0 %v1246
    %1517 = vmatprep.subr.bf16.mxu0 0
    %1518 = vmatpush1.bf16.msra.mxu0 %v1247
    %1519 = vmatprep.subr.bf16.mxu0 0
    %1520 = vmatpush1.bf16.msra.mxu0 %v1248
    %1521 = vmatprep.mubr.bf16.mxu0 %v443
    %1522 = vmatmul.mubr.bf16.gmra.mrb[0].mxu0 %v442
    %v1523 = vpop.f32.mrb[0].mxu0
    %v1524 = vadd.f32 %v719, %v1523
    %v1525 = vpop.f32.mrb[0].mxu0
    %v1526 = vpop.f32.mrb[0].mxu0
    %v1527 = vpop.f32.mrb[0].mxu0
    %1528 = vdwg.mxu0
    %1529 = vmatprep.subr.bf16.mxu0 0
    %1530 = vmatpush1.bf16.msra.mxu0 %v1249
    %1531 = vmatprep.subr.bf16.mxu0 0
    %1532 = vmatpush1.bf16.msra.mxu0 %v1250
    %1533 = vmatprep.subr.bf16.mxu0 0
    %1534 = vmatpush1.bf16.msra.mxu0 %v1251
    %1535 = vmatprep.subr.bf16.mxu0 0
    %1536 = vmatpush1.bf16.msra.mxu0 %v1252
    %1537 = vmatprep.subr.bf16.mxu0 0
    %1538 = vmatpush1.bf16.msra.mxu0 %v1253
    %1539 = vmatprep.subr.bf16.mxu0 0
    %1540 = vmatpush1.bf16.msra.mxu0 %v1254
    %1541 = vmatprep.subr.bf16.mxu0 0
    %1542 = vmatpush1.bf16.msra.mxu0 %v1255
    %1543 = vmatprep.subr.bf16.mxu0 0
    %1544 = vmatpush1.bf16.msra.mxu0 %v1256
    %1545 = vmatprep.subr.bf16.mxu0 0
    %1546 = vmatpush1.bf16.msra.mxu0 %v1257
    %1547 = vmatprep.subr.bf16.mxu0 0
    %1548 = vmatpush1.bf16.msra.mxu0 %v1258
    %1549 = vmatprep.subr.bf16.mxu0 0
    %1550 = vmatpush1.bf16.msra.mxu0 %v1259
    %1551 = vmatprep.subr.bf16.mxu0 0
    %1552 = vmatpush1.bf16.msra.mxu0 %v1260
    %1553 = vmatprep.subr.bf16.mxu0 0
    %1554 = vmatpush1.bf16.msra.mxu0 %v1261
    %1555 = vmatprep.subr.bf16.mxu0 0
    %1556 = vmatpush1.bf16.msra.mxu0 %v1262
    %1557 = vmatprep.subr.bf16.mxu0 0
    %1558 = vmatpush1.bf16.msra.mxu0 %v1263
    %1559 = vmatprep.subr.bf16.mxu0 0
    %1560 = vmatpush1.bf16.msra.mxu0 %v1264
    %1561 = vmatprep.mubr.bf16.mxu0 %v445
    %1562 = vmatmul.mubr.bf16.gmra.mrb[0].mxu0 %v444
    %v1563 = vpop.f32.mrb[0].mxu0
    %v1564 = vadd.f32 %v1524, %v1563
    %v1565 = vpop.f32.mrb[0].mxu0
    %v1566 = vpop.f32.mrb[0].mxu0
    %v1567 = vpop.f32.mrb[0].mxu0
    %1568 = vdwg.mxu0
    %1569 = vmatprep.subr.bf16.mxu0 0
    %1570 = vmatpush1.bf16.msra.mxu0 %v1265
    %1571 = vmatprep.subr.bf16.mxu0 0
    %1572 = vmatpush1.bf16.msra.mxu0 %v1266
    %1573 = vmatprep.subr.bf16.mxu0 0
    %1574 = vmatpush1.bf16.msra.mxu0 %v1267
    %1575 = vmatprep.subr.bf16.mxu0 0
    %1576 = vmatpush1.bf16.msra.mxu0 %v1268
    %1577 = vmatprep.subr.bf16.mxu0 0
    %1578 = vmatpush1.bf16.msra.mxu0 %v1269
    %1579 = vmatprep.subr.bf16.mxu0 0
    %1580 = vmatpush1.bf16.msra.mxu0 %v1270
    %1581 = vmatprep.subr.bf16.mxu0 0
    %1582 = vmatpush1.bf16.msra.mxu0 %v1271
    %1583 = vmatprep.subr.bf16.mxu0 0
    %1584 = vmatpush1.bf16.msra.mxu0 %v1272
    %1585 = vmatprep.subr.bf16.mxu0 0
    %1586 = vmatpush1.bf16.msra.mxu0 %v1273
    %1587 = vmatprep.subr.bf16.mxu0 0
    %1588 = vmatpush1.bf16.msra.mxu0 %v1274
    %1589 = vmatprep.subr.bf16.mxu0 0
    %1590 = vmatpush1.bf16.msra.mxu0 %v1275
    %1591 = vmatprep.subr.bf16.mxu0 0
    %1592 = vmatpush1.bf16.msra.mxu0 %v1276
    %1593 = vmatprep.subr.bf16.mxu0 0
    %1594 = vmatpush1.bf16.msra.mxu0 %v1277
    %1595 = vmatprep.subr.bf16.mxu0 0
    %1596 = vmatpush1.bf16.msra.mxu0 %v1278
    %1597 = vmatprep.subr.bf16.mxu0 0
    %1598 = vmatpush1.bf16.msra.mxu0 %v1279
    %1599 = vmatprep.subr.bf16.mxu0 0
    %1600 = vmatpush1.bf16.msra.mxu0 %v1280
    %1601 = vmatprep.mubr.bf16.mxu0 %v447
    %1602 = vmatmul.mubr.bf16.gmra.mrb[0].mxu0 %v446
    %v1603 = vpop.f32.mrb[0].mxu0
    %v1604 = vadd.f32 %v1564, %v1603
    %v1605 = vpop.f32.mrb[0].mxu0
    %v1606 = vpop.f32.mrb[0].mxu0
    %v1607 = vpop.f32.mrb[0].mxu0
    %1608 = vdwg.mxu0
    %1609 = vmatprep.subr.bf16.mxu0 0
    %1610 = vmatpush1.bf16.msra.mxu0 %v1281
    %1611 = vmatprep.subr.bf16.mxu0 0
    %1612 = vmatpush1.bf16.msra.mxu0 %v1282
    %1613 = vmatprep.subr.bf16.mxu0 0
    %1614 = vmatpush1.bf16.msra.mxu0 %v1283
    %1615 = vmatprep.subr.bf16.mxu0 0
    %1616 = vmatpush1.bf16.msra.mxu0 %v1284
    %1617 = vmatprep.subr.bf16.mxu0 0
    %1618 = vmatpush1.bf16.msra.mxu0 %v1285
    %1619 = vmatprep.subr.bf16.mxu0 0
    %1620 = vmatpush1.bf16.msra.mxu0 %v1286
    %1621 = vmatprep.subr.bf16.mxu0 0
    %1622 = vmatpush1.bf16.msra.mxu0 %v1287
    %1623 = vmatprep.subr.bf16.mxu0 0
    %1624 = vmatpush1.bf16.msra.mxu0 %v1288
    %1625 = vmatprep.subr.bf16.mxu0 0
    %1626 = vmatpush1.bf16.msra.mxu0 %v1289
    %1627 = vmatprep.subr.bf16.mxu0 0
    %1628 = vmatpush1.bf16.msra.mxu0 %v1290
    %1629 = vmatprep.subr.bf16.mxu0 0
    %1630 = vmatpush1.bf16.msra.mxu0 %v1291
    %1631 = vmatprep.subr.bf16.mxu0 0
    %1632 = vmatpush1.bf16.msra.mxu0 %v1292
    %1633 = vmatprep.subr.bf16.mxu0 0
    %1634 = vmatpush1.bf16.msra.mxu0 %v1293
    %1635 = vmatprep.subr.bf16.mxu0 0
    %1636 = vmatpush1.bf16.msra.mxu0 %v1294
    %1637 = vmatprep.subr.bf16.mxu0 0
    %1638 = vmatpush1.bf16.msra.mxu0 %v1295
    %1639 = vmatprep.subr.bf16.mxu0 0
    %1640 = vmatpush1.bf16.msra.mxu0 %v1296
    %1641 = vmatprep.mubr.bf16.mxu0 %v449
    %1642 = vmatmul.mubr.bf16.gmra.mrb[0].mxu0 %v448
    %v1643 = vpop.f32.mrb[0].mxu0
    %v1644 = vadd.f32 %v1604, %v1643
    %v1645 = vpop.f32.mrb[0].mxu0
    %v1646 = vpop.f32.mrb[0].mxu0
    %v1647 = vpop.f32.mrb[0].mxu0
    %1648 = vdwg.mxu0
    %1649 = vmatprep.subr.bf16.mxu0 0
    %1650 = vmatpush1.bf16.msra.mxu0 %v1297
    %1651 = vmatprep.subr.bf16.mxu0 0
    %1652 = vmatpush1.bf16.msra.mxu0 %v1298
    %1653 = vmatprep.subr.bf16.mxu0 0
    %1654 = vmatpush1.bf16.msra.mxu0 %v1299
    %1655 = vmatprep.subr.bf16.mxu0 0
    %1656 = vmatpush1.bf16.msra.mxu0 %v1300
    %1657 = vmatprep.subr.bf16.mxu0 0
    %1658 = vmatpush1.bf16.msra.mxu0 %v1301
    %1659 = vmatprep.subr.bf16.mxu0 0
    %1660 = vmatpush1.bf16.msra.mxu0 %v1302
    %1661 = vmatprep.subr.bf16.mxu0 0
    %1662 = vmatpush1.bf16.msra.mxu0 %v1303
    %1663 = vmatprep.subr.bf16.mxu0 0
    %1664 = vmatpush1.bf16.msra.mxu0 %v1304
    %1665 = vmatprep.subr.bf16.mxu0 0
    %1666 = vmatpush1.bf16.msra.mxu0 %v1305
    %1667 = vmatprep.subr.bf16.mxu0 0
    %1668 = vmatpush1.bf16.msra.mxu0 %v1306
    %1669 = vmatprep.subr.bf16.mxu0 0
    %1670 = vmatpush1.bf16.msra.mxu0 %v1307
    %1671 = vmatprep.subr.bf16.mxu0 0
    %1672 = vmatpush1.bf16.msra.mxu0 %v1308
    %1673 = vmatprep.subr.bf16.mxu0 0
    %1674 = vmatpush1.bf16.msra.mxu0 %v1309
    %1675 = vmatprep.subr.bf16.mxu0 0
    %1676 = vmatpush1.bf16.msra.mxu0 %v1310
    %1677 = vmatprep.subr.bf16.mxu0 0
    %1678 = vmatpush1.bf16.msra.mxu0 %v1311
    %1679 = vmatprep.subr.bf16.mxu0 0
    %1680 = vmatpush1.bf16.msra.mxu0 %v1312
    %1681 = vmatprep.mubr.bf16.mxu0 %v451
    %1682 = vmatmul.mubr.bf16.gmra.mrb[0].mxu0 %v450
    %v1683 = vpop.f32.mrb[0].mxu0
    %v1684 = vadd.f32 %v1644, %v1683
    %v1685 = vpop.f32.mrb[0].mxu0
    %v1686 = vpop.f32.mrb[0].mxu0
    %v1687 = vpop.f32.mrb[0].mxu0
    %1688 = vdwg.mxu0
    %1689 = vmatprep.subr.bf16.mxu0 0
    %1690 = vmatpush1.bf16.msra.mxu0 %v1313
    %1691 = vmatprep.subr.bf16.mxu0 0
    %1692 = vmatpush1.bf16.msra.mxu0 %v1314
    %1693 = vmatprep.subr.bf16.mxu0 0
    %1694 = vmatpush1.bf16.msra.mxu0 %v1315
    %1695 = vmatprep.subr.bf16.mxu0 0
    %1696 = vmatpush1.bf16.msra.mxu0 %v1316
    %1697 = vmatprep.subr.bf16.mxu0 0
    %1698 = vmatpush1.bf16.msra.mxu0 %v1317
    %1699 = vmatprep.subr.bf16.mxu0 0
    %1700 = vmatpush1.bf16.msra.mxu0 %v1318
    %1701 = vmatprep.subr.bf16.mxu0 0
    %1702 = vmatpush1.bf16.msra.mxu0 %v1319
    %1703 = vmatprep.subr.bf16.mxu0 0
    %1704 = vmatpush1.bf16.msra.mxu0 %v1320
    %1705 = vmatprep.subr.bf16.mxu0 0
    %1706 = vmatpush1.bf16.msra.mxu0 %v1321
    %1707 = vmatprep.subr.bf16.mxu0 0
    %1708 = vmatpush1.bf16.msra.mxu0 %v1322
    %1709 = vmatprep.subr.bf16.mxu0 0
    %1710 = vmatpush1.bf16.msra.mxu0 %v1323
    %1711 = vmatprep.subr.bf16.mxu0 0
    %1712 = vmatpush1.bf16.msra.mxu0 %v1324
    %1713 = vmatprep.subr.bf16.mxu0 0
    %1714 = vmatpush1.bf16.msra.mxu0 %v1325
    %1715 = vmatprep.subr.bf16.mxu0 0
    %1716 = vmatpush1.bf16.msra.mxu0 %v1326
    %1717 = vmatprep.subr.bf16.mxu0 0
    %1718 = vmatpush1.bf16.msra.mxu0 %v1327
    %1719 = vmatprep.subr.bf16.mxu0 0
    %1720 = vmatpush1.bf16.msra.mxu0 %v1328
    %1721 = vmatprep.mubr.bf16.mxu0 %v453
    %1722 = vmatmul.mubr.bf16.gmra.mrb[0].mxu0 %v452
    %v1723 = vpop.f32.mrb[0].mxu0
    %v1724 = vadd.f32 %v1684, %v1723
    %v1725 = vpop.f32.mrb[0].mxu0
    %v1726 = vpop.f32.mrb[0].mxu0
    %v1727 = vpop.f32.mrb[0].mxu0
    %1728 = vdwg.mxu0
    %1729 = vmatprep.subr.bf16.mxu0 0
    %1730 = vmatpush1.bf16.msra.mxu0 %v1329
    %1731 = vmatprep.subr.bf16.mxu0 0
    %1732 = vmatpush1.bf16.msra.mxu0 %v1330
    %1733 = vmatprep.subr.bf16.mxu0 0
    %1734 = vmatpush1.bf16.msra.mxu0 %v1331
    %1735 = vmatprep.subr.bf16.mxu0 0
    %1736 = vmatpush1.bf16.msra.mxu0 %v1332
    %1737 = vmatprep.subr.bf16.mxu0 0
    %1738 = vmatpush1.bf16.msra.mxu0 %v1333
    %1739 = vmatprep.subr.bf16.mxu0 0
    %1740 = vmatpush1.bf16.msra.mxu0 %v1334
    %1741 = vmatprep.subr.bf16.mxu0 0
    %1742 = vmatpush1.bf16.msra.mxu0 %v1335
    %1743 = vmatprep.subr.bf16.mxu0 0
    %1744 = vmatpush1.bf16.msra.mxu0 %v1336
    %1745 = vmatprep.subr.bf16.mxu0 0
    %1746 = vmatpush1.bf16.msra.mxu0 %v1337
    %1747 = vmatprep.subr.bf16.mxu0 0
    %1748 = vmatpush1.bf16.msra.mxu0 %v1338
    %1749 = vmatprep.subr.bf16.mxu0 0
    %1750 = vmatpush1.bf16.msra.mxu0 %v1339
    %1751 = vmatprep.subr.bf16.mxu0 0
    %1752 = vmatpush1.bf16.msra.mxu0 %v1340
    %1753 = vmatprep.subr.bf16.mxu0 0
    %1754 = vmatpush1.bf16.msra.mxu0 %v1341
    %1755 = vmatprep.subr.bf16.mxu0 0
    %1756 = vmatpush1.bf16.msra.mxu0 %v1342
    %1757 = vmatprep.subr.bf16.mxu0 0
    %1758 = vmatpush1.bf16.msra.mxu0 %v1343
    %1759 = vmatprep.subr.bf16.mxu0 0
    %1760 = vmatpush1.bf16.msra.mxu0 %v1344
    %1761 = vmatprep.mubr.bf16.mxu0 %v455
    %1762 = vmatmul.mubr.bf16.gmra.mrb[0].mxu0 %v454
    %v1763 = vpop.f32.mrb[0].mxu0
    %v1764 = vadd.f32 %v1724, %v1763
    %v1765 = vpop.f32.mrb[0].mxu0
    %v1766 = vpop.f32.mrb[0].mxu0
    %v1767 = vpop.f32.mrb[0].mxu0
    %1768 = vdwg.mxu0
    %1769 = vmatprep.subr.bf16.mxu0 0
    %1770 = vmatpush1.bf16.msra.mxu0 %v1345
    %1771 = vmatprep.subr.bf16.mxu0 0
    %1772 = vmatpush1.bf16.msra.mxu0 %v1346
    %1773 = vmatprep.subr.bf16.mxu0 0
    %1774 = vmatpush1.bf16.msra.mxu0 %v1347
    %1775 = vmatprep.subr.bf16.mxu0 0
    %1776 = vmatpush1.bf16.msra.mxu0 %v1348
    %1777 = vmatprep.subr.bf16.mxu0 0
    %1778 = vmatpush1.bf16.msra.mxu0 %v1349
    %1779 = vmatprep.subr.bf16.mxu0 0
    %1780 = vmatpush1.bf16.msra.mxu0 %v1350
    %1781 = vmatprep.subr.bf16.mxu0 0
    %1782 = vmatpush1.bf16.msra.mxu0 %v1351
    %1783 = vmatprep.subr.bf16.mxu0 0
    %1784 = vmatpush1.bf16.msra.mxu0 %v1352
    %1785 = vmatprep.subr.bf16.mxu0 0
    %1786 = vmatpush1.bf16.msra.mxu0 %v1353
    %1787 = vmatprep.subr.bf16.mxu0 0
    %1788 = vmatpush1.bf16.msra.mxu0 %v1354
    %1789 = vmatprep.subr.bf16.mxu0 0
    %1790 = vmatpush1.bf16.msra.mxu0 %v1355
    %1791 = vmatprep.subr.bf16.mxu0 0
    %1792 = vmatpush1.bf16.msra.mxu0 %v1356
    %1793 = vmatprep.subr.bf16.mxu0 0
    %1794 = vmatpush1.bf16.msra.mxu0 %v1357
    %1795 = vmatprep.subr.bf16.mxu0 0
    %1796 = vmatpush1.bf16.msra.mxu0 %v1358
    %1797 = vmatprep.subr.bf16.mxu0 0
    %1798 = vmatpush1.bf16.msra.mxu0 %v1359
    %1799 = vmatprep.subr.bf16.mxu0 0
    %1800 = vmatpush1.bf16.msra.mxu0 %v1360
    %1801 = vmatprep.mubr.bf16.mxu0 %v457
    %1802 = vmatmul.mubr.bf16.gmra.mrb[0].mxu0 %v456
    %v1803 = vpop.f32.mrb[0].mxu0
    %v1804 = vadd.f32 %v1764, %v1803
    %v1805 = vpop.f32.mrb[0].mxu0
    %v1806 = vpop.f32.mrb[0].mxu0
    %v1807 = vpop.f32.mrb[0].mxu0
    %1808 = vdwg.mxu0
    %vm1809 = vcmask 254976
    %1810 = vst.msk [vmem:[#allocation4] sm:$0x3] %vm1809, %v1804
    %v1811 = vld [vmem:[%s5] sm:$0xff]
    %v1812 = vld [vmem:[%s5 + $0x8] sm:$0xff]
    %v1813 = vld [vmem:[%s5 + $0x10] sm:$0xff]
    %v1814 = vld [vmem:[%s5 + $0x18] sm:$0xff]
    %v1815 = vld [vmem:[%s6] sm:$0x1]
    %v1817 = vlaneseq
    %v1818 = vshrl.u32 %v1817, 7
    %v1819 = vsub.s32 0, %v1818
    %v1820 = vrot.slane %v1815, %v1819
    %vm1822 = vcmask 261120
    %v1824 = vsel %vm1822, %v1804, 0
    %1826 = vmatprep.subr.mxu0 0.0
    %1827 = vmatpush1.msra.mxu0 %v1811
    %1828 = vmatprep.subr.mxu0 0.0
    %1829 = vmatpush1.msra.mxu0 %v1812
    %1830 = vmatprep.subr.mxu0 0.0
    %1831 = vmatpush1.msra.mxu0 %v1813
    %1832 = vmatprep.subr.mxu0 0.0
    %1833 = vmatpush1.msra.mxu0 %v1814
    %1834 = vmatprep.subr.mxu0 0.0
    %1835 = vmatpush1.msra.mxu0 0.0
    %1836 = vmatprep.subr.mxu0 0.0
    %1837 = vmatpush1.msra.mxu0 0.0
    %1838 = vmatprep.subr.mxu0 0.0
    %1839 = vmatpush1.msra.mxu0 0.0
    %1840 = vmatprep.subr.mxu0 0.0
    %1841 = vmatpush1.msra.mxu0 0.0
    %1842 = vmatprep.subr.mxu0 0.0
    %1843 = vmatpush1.msra.mxu0 0.0
    %1844 = vmatprep.subr.mxu0 0.0
    %1845 = vmatpush1.msra.mxu0 0.0
    %1846 = vmatprep.subr.mxu0 0.0
    %1847 = vmatpush1.msra.mxu0 0.0
    %1848 = vmatprep.subr.mxu0 0.0
    %1849 = vmatpush1.msra.mxu0 0.0
    %1850 = vmatprep.subr.mxu0 0.0
    %1851 = vmatpush1.msra.mxu0 0.0
    %1852 = vmatprep.subr.mxu0 0.0
    %1853 = vmatpush1.msra.mxu0 0.0
    %1854 = vmatprep.subr.mxu0 0.0
    %1855 = vmatpush1.msra.mxu0 0.0
    %1856 = vmatprep.subr.mxu0 0.0
    %1857 = vmatpush1.msra.mxu0 0.0
    %1858 = vmatprep.subr.mxu0 0.0
    %1859 = vmatpush1.msra.mxu0 0.0
    %1860 = vmatprep.subr.mxu0 0.0
    %1861 = vmatpush1.msra.mxu0 0.0
    %1862 = vmatprep.subr.mxu0 0.0
    %1863 = vmatpush1.msra.mxu0 0.0
    %1864 = vmatprep.subr.mxu0 0.0
    %1865 = vmatpush1.msra.mxu0 0.0
    %1866 = vmatprep.subr.mxu0 0.0
    %1867 = vmatpush1.msra.mxu0 0.0
    %1868 = vmatprep.subr.mxu0 0.0
    %1869 = vmatpush1.msra.mxu0 0.0
    %1870 = vmatprep.subr.mxu0 0.0
    %1871 = vmatpush1.msra.mxu0 0.0
    %1872 = vmatprep.subr.mxu0 0.0
    %1873 = vmatpush1.msra.mxu0 0.0
    %1874 = vmatprep.subr.mxu0 0.0
    %1875 = vmatpush1.msra.mxu0 0.0
    %1876 = vmatprep.subr.mxu0 0.0
    %1877 = vmatpush1.msra.mxu0 0.0
    %1878 = vmatprep.subr.mxu0 0.0
    %1879 = vmatpush1.msra.mxu0 0.0
    %1880 = vmatprep.subr.mxu0 0.0
    %1881 = vmatpush1.msra.mxu0 0.0
    %1882 = vmatprep.subr.mxu0 0.0
    %1883 = vmatpush1.msra.mxu0 0.0
    %1884 = vmatprep.subr.mxu0 0.0
    %1885 = vmatpush1.msra.mxu0 0.0
    %1886 = vmatprep.subr.mxu0 0.0
    %1887 = vmatpush1.msra.mxu0 0.0
    %1888 = vmatprep.subr.mxu0 0.0
    %1889 = vmatpush1.msra.mxu0 0.0
    %1890 = vmatprep.mubr.f32.mxu0 0.0
    %1891 = vmatmul.mubr.f32.gmra.mrb[0].mxu0 %v1824
    %v1892 = vpop.f32.mrb[0].mxu0
    %v1893 = vadd.f32 %v1820, %v1892
    %v1894 = vpop.f32.mrb[0].mxu0
    %1895 = vdwg.mxu0
    %vm1896 = vcmask 74752
    %1897 = vst.msk [vmem:[#allocation2] sm:$0x3] %vm1896, %v1893
    // Predicated region
    $region30: #{custom_model_forward.1} parent=1 // pred_check
      _
    $region31: #{custom_model_forward.1} parent=1 // pred_check_branch
      %1899 = sbr.rel (0) target = $region33
    $region32: #{custom_model_forward.1} parent=1 // pred_region
      %s1901 = ssub.s32 32, 32
      %1902 = vsyncadd [#allocation3], %s1901
      %s1904 = sshll.u32 [#allocation2], 4
      %s1905 = int_to_ptr.vmem [resolvable:$true] %s1904
      %1907 = dma.vmem_to_hbm [thread:$0]  %s1905, 32, %s7, [#allocation3]
    $region33: #{custom_model_forward.1} parent=1 // pred_fallthru
      _
    // Predicated region
    $region34: #{custom_model_forward.1} parent=1 // pred_check
      _
    $region35: #{custom_model_forward.1} parent=1 // pred_check_branch
      %1909 = sbr.rel (0) target = $region37
    $region36: #{custom_model_forward.1} parent=1 // pred_region
      %s1911 = ssub.s32 32, 32
      %1912 = vsyncadd [#allocation5], %s1911
      %s1914 = sshll.u32 [#allocation4], 4
      %s1915 = int_to_ptr.vmem [resolvable:$true] %s1914
      %1917 = dma.vmem_to_hbm [thread:$0]  %s1915, 32, %s8, [#allocation5]
    $region37: #{custom_model_forward.1} parent=1 // pred_fallthru
      _
    // Predicated region
    $region38: #{custom_model_forward.1} parent=1 // pred_check
      _
    $region39: #{custom_model_forward.1} parent=1 // pred_check_branch
      %1919 = sbr.rel (0) target = $region41
    $region40: #{custom_model_forward.1} parent=1 // pred_region
      %1920 = dma.done [#allocation3], 32
    $region41: #{custom_model_forward.1} parent=1 // pred_fallthru
      _
    // Predicated region
    $region42: #{custom_model_forward.1} parent=1 // pred_check
      _
    $region43: #{custom_model_forward.1} parent=1 // pred_check_branch
      %1922 = sbr.rel (0) target = $region45
    $region44: #{custom_model_forward.1} parent=1 // pred_region
      %1923 = dma.done [#allocation5], 32
    $region45: #{custom_model_forward.1} parent=1 // pred_fallthru
      _
    %1924 = vsyncpa [#allocation3], 1
    %1925 = vsyncpa [#allocation5], 1

</llo_original>
